<compile_context>
chip_gen: v7x
topology: tpu7x:2x2x1
jax: 0.10.0
libtpu: 0.0.40
codegen_flags: <defaults>
</compile_context>

<pallas_src>
import math
import functools

import jax
import jax.numpy as jnp
from jax.experimental import pallas as pl
from jax.experimental.pallas import tpu as pltpu


# --------------------------------- small helpers ---------------------------------

def _round_up(x, m):
    return ((x + m - 1) // m) * m


def _pick_tile(total, cap):
    """Largest multiple-of-128 divisor of `total` that is <= cap; else the full extent."""
    if total <= cap or total % 128 != 0:
        return total
    t = (cap // 128) * 128
    while t >= 128:
        if total % t == 0:
            return t
        t -= 128
    return total


def _fs(shape):
    """Full-array BlockSpec; index_map ignores the grid index."""
    zeros = (0,) * len(shape)
    return pl.BlockSpec(tuple(shape), lambda *_: zeros)


# --------------------------- in-kernel building blocks ---------------------------

def _img_chunk_pool_sum(img, bb_w3, bb_b3):
    """ReLU(1x1-conv stand-in) partial pooled sums over one HW chunk.

    img:   (B, Cin, T)   NCHW channel planes, flattened spatial chunk
    bb_w3: (Cin, Cbb, 1) one (Cbb,1) column per input channel
    bb_b3: (1, Cbb, 1)
    returns (B, Cbb) partial sums (divide by total HW at finalize).
    """
    y = img[:, 0:1, :] * bb_w3[0:1]                       # (B,1,T)*(1,Cbb,1)->(B,Cbb,T)
    for i in range(1, img.shape[1]):                      # Cin tiny & static: VPU FMAs
        y = y + img[:, i:i + 1, :] * bb_w3[i:i + 1]
    y = jnp.maximum(y + bb_b3, 0.0)                       # bias + ReLU
    return jnp.sum(y, axis=-1)                            # partial pool sum -> (B, Cbb)


def _text_encoder(emb_cls, enc_w, enc_b):
    """Pointwise tanh encoder stand-in, applied to the CLS token only."""
    return jnp.tanh(jnp.dot(emb_cls, enc_w, preferred_element_type=jnp.float32) + enc_b)


# ----------------------------------- kernels -------------------------------------

def shopee_train_feature_kernel(img_ref, emb_ref, bb_w_ref, bb_b_ref,
                                enc_w_ref, enc_b_ref,
                                fc_w_ref, fc_b_ref, bn_g_ref, bn_b_ref,
                                o_ref, pool_acc, *,
                                fc_dim, inv_hw, feat_pad, eps=1e-5):
    """Image branch (chunked pool) + text branch + fused fc/BN + F.normalize.

    Grid axis 0 iterates HW chunks ("arbitrary"); pooled sums accumulate in `pool_acc`
    and everything downstream runs once on the last step.
    """
    h = pl.program_id(0)

    @pl.when(h == 0)
    def _init():
        pool_acc[...] = jnp.zeros_like(pool_acc)

    pool_acc[...] += _img_chunk_pool_sum(img_ref[...], bb_w_ref[...], bb_b_ref[...])

    @pl.when(h == pl.num_programs(0) - 1)
    def _finalize():
        img_feat = pool_acc[...] * inv_hw                            # (B, Cbb) avg pool
        # TODO(synk): nn.Dropout treated as identity for determinism.
        txt = _text_encoder(emb_ref[...], enc_w_ref[...], enc_b_ref[...])   # (B, Hh)
        # ONE block-diagonal matmul replaces img_fc + text_fc (half the MXU pushes).
        cat_in = jnp.concatenate([img_feat, txt], axis=-1)           # (B, Cbb+Hh)
        hfc = jnp.dot(cat_in, fc_w_ref[...],
                      preferred_element_type=jnp.float32) + fc_b_ref[...]   # (B, 2*fc)
        # BatchNorm1d (training-mode batch stats) is per-column -> joint BN is exact.
        mu = jnp.mean(hfc, axis=0, keepdims=True)
        var = jnp.mean((hfc - mu) ** 2, axis=0, keepdims=True)
        y = (hfc - mu) * jax.lax.rsqrt(var + eps) * bn_g_ref[...] + bn_b_ref[...]
        # ReLU only on the text half (columns >= fc_dim).
        col = jax.lax.broadcasted_iota(jnp.int32, y.shape, 1)
        feats = jnp.where(col >= fc_dim, jnp.maximum(y, 0.0), y)
        # F.normalize: x / max(||x||, 1e-12) == x * rsqrt(max(||x||^2, 1e-24))  (EUP)
        x_inv = jax.lax.rsqrt(
            jnp.maximum(jnp.sum(feats * feats, axis=-1, keepdims=True), 1e-24))
        feats_n = feats * x_inv
        pad = feat_pad - feats_n.shape[1]
        if pad:  # lane-dense store: zero-pad feature axis to a multiple of 128
            feats_n = jnp.concatenate(
                [feats_n, jnp.zeros((feats_n.shape[0], pad), jnp.float32)], axis=-1)
        o_ref[...] = feats_n


def shopee_eval_feature_kernel(img_ref, emb_ref, bb_w_ref, bb_b_ref,
                               enc_w_ref, enc_b_ref,
                               txt_fc_w_ref, txt_fc_b_ref, txt_bn_g_ref, txt_bn_b_ref,
                               o_ref, pool_acc, *, inv_hw, out_pad, eps=1e-5):
    """Eval: image branch skips fc/BN (matches `use_fc and self.training`);
    text branch always applies fc + BN + ReLU. Output is lane-dense padded."""
    h = pl.program_id(0)

    @pl.when(h == 0)
    def _init():
        pool_acc[...] = jnp.zeros_like(pool_acc)

    pool_acc[...] += _img_chunk_pool_sum(img_ref[...], bb_w_ref[...], bb_b_ref[...])

    @pl.when(h == pl.num_programs(0) - 1)
    def _finalize():
        img_feat = pool_acc[...] * inv_hw
        txt = _text_encoder(emb_ref[...], enc_w_ref[...], enc_b_ref[...])
        hfc = jnp.dot(txt, txt_fc_w_ref[...],
                      preferred_element_type=jnp.float32) + txt_fc_b_ref[...]
        # TODO(synk): eval-mode BatchNorm running statistics are not tracked; batch stats used.
        mu = jnp.mean(hfc, axis=0, keepdims=True)
        var = jnp.mean((hfc - mu) ** 2, axis=0, keepdims=True)
        tbn = jnp.maximum(
            (hfc - mu) * jax.lax.rsqrt(var + eps) * txt_bn_g_ref[...] + txt_bn_b_ref[...],
            0.0)
        feats = jnp.concatenate([img_feat, tbn], axis=-1)            # (B, Cbb+fc)
        pad = out_pad - feats.shape[1]
        if pad:
            feats = jnp.concatenate(
                [feats, jnp.zeros((feats.shape[0], pad), jnp.float32)], axis=-1)
        o_ref[...] = feats


def arc_margin_kernel(feats_ref, label_ref, w_ref, o_ref, *,
                      cos_m, sin_m, th, mm, scale, tile_c):
    """ArcMarginProduct.forward (easy_margin=False, ls_eps=0.0), one class tile per step.

    feats_ref : (B, Fpad)      pre-normalized features, f32
    label_ref : (B, 1)         int32 labels (single vectorized compare -> one-hot)
    w_ref     : (Fpad, tile_c) bf16 weight tile, class axis zero-padded
    """
    c = pl.program_id(0)
    w_bf = w_ref[...]
    w32 = w_bf.astype(jnp.float32)
    # Weight norm folded AFTER the matmul as a (1, tile_c) column scale: no second
    # weight-sized tile materialized, padded (all-zero) columns stay exactly 0.
    w_inv = jax.lax.rsqrt(jnp.maximum(jnp.sum(w32 * w32, axis=0, keepdims=True), 1e-24))
    cosine = jnp.dot(feats_ref[...].astype(jnp.bfloat16), w_bf,
                     preferred_element_type=jnp.float32) * w_inv       # (B, tile_c)
    # One-hot for this class tile via a single vector compare.
    cls = jax.lax.broadcasted_iota(jnp.int32, cosine.shape, 1) + c * tile_c
    sel = (cls == label_ref[...]).astype(jnp.float32)
    # phi only at the label column: gather cos_b per row, scalar margin math, re-inject.
    cos_b = jnp.sum(cosine * sel, axis=-1, keepdims=True)              # (B, 1)
    sin_b = jnp.sqrt(jnp.maximum(1.0 - cos_b * cos_b, 0.0))
    phi_b = cos_b * cos_m - sin_b * sin_m
    phi_b = jnp.where(cos_b > th, phi_b, cos_b - mm)
    o_ref[...] = (cosine + sel * (phi_b - cos_b)) * scale


# ----------------------------------- wrapper --------------------------------------

@functools.partial(jax.jit, static_argnames=("training", "scale", "margin",
                                              "class_tile", "hw_tile_cap"))
def shopee_forward(params, input_ids, attention_mask, image, label, *,
                   training=True, scale=30.0, margin=0.5,
                   class_tile=2048, hw_tile_cap=2048):
    del attention_mask                                      # unused by the stand-in encoder
    B, Cin, H, W = image.shape
    HW = H * W
    img = image.reshape(B, Cin, HW).astype(jnp.float32)     # free reshape, NO NHWC transpose
    hw_tile = _pick_tile(HW, hw_tile_cap)
    n_hw = HW // hw_tile

    # Only the CLS token is consumed downstream and the stand-in encoder is pointwise
    # per token, so gather/slice it BEFORE the encoder matmul (exactly equivalent).
    emb_cls = jnp.take(params["emb"], input_ids[:, 0], axis=0)          # (B, Hh)

    Cbb = params["img_bb_w"].shape[1]
    Hh = params["enc_w"].shape[0]
    fc = params["img_fc_w"].shape[1]
    n_classes = params["arc_w"].shape[0]

    bb_w3 = params["img_bb_w"][:, :, None]                  # (Cin, Cbb, 1)
    bb_b3 = params["img_bb_b"].reshape(1, Cbb, 1)
    enc_b = params["enc_b"].reshape(1, Hh)

    img_spec = pl.BlockSpec((B, Cin, hw_tile), lambda h: (0, 0, h))
    feat_cparams = pltpu.CompilerParams(dimension_semantics=("arbitrary",))

    if training:
        feat_dim = 2 * fc
        feat_pad = _round_up(feat_dim, 128)

        # Fused block-diagonal fc: rows [0,Cbb) -> img_fc cols [0,fc), rows [Cbb,..) ->
        # text_fc cols [fc,2fc).  Joint per-column BN == two separate BatchNorm1d.
        fc_w = jnp.zeros((Cbb + Hh, feat_dim), jnp.float32)
        fc_w = fc_w.at[:Cbb, :fc].set(params["img_fc_w"])
        fc_w = fc_w.at[Cbb:, fc:].set(params["text_fc_w"])
        fc_b = jnp.concatenate([params["img_fc_b"], params["text_fc_b"]]).reshape(1, feat_dim)
        bn_g = jnp.concatenate([params["img_bn_g"], params["text_bn_g"]]).reshape(1, feat_dim)
        bn_b = jnp.concatenate([params["img_bn_b"], params["text_bn_b"]]).reshape(1, feat_dim)

        feat_inputs = [img, emb_cls, bb_w3, bb_b3, params["enc_w"], enc_b,
                       fc_w, fc_b, bn_g, bn_b]
        in_specs = [img_spec] + [_fs(a.shape) for a in feat_inputs[1:]]

        feats_n = pl.pallas_call(
            functools.partial(shopee_train_feature_kernel,
                              fc_dim=fc, inv_hw=1.0 / HW, feat_pad=feat_pad),
            out_shape=jax.ShapeDtypeStruct((B, feat_pad), jnp.float32),
            grid_spec=pltpu.PrefetchScalarGridSpec(
                num_scalar_prefetch=0, grid=(n_hw,),
                in_specs=in_specs,
                out_specs=pl.BlockSpec((B, feat_pad), lambda h: (0, 0)),
                scratch_shapes=[pltpu.VMEM((B, Cbb), jnp.float32)]),
            compiler_params=feat_cparams,
        )(*feat_inputs)

        # ---- class-tiled ArcMargin: bf16 weight in HBM, "parallel" class grid ----
        assert class_tile % 128 == 0
        c_pad = _round_up(n_classes, 128)
        if c_pad > class_tile:
            c_pad = _round_up(c_pad, class_tile)
            tile_c = class_tile
        else:
            tile_c = c_pad
        n_ct = c_pad // tile_c

        arc_wt = jnp.zeros((feat_pad, c_pad), jnp.float32)
        arc_wt = arc_wt.at[:feat_dim, :n_classes].set(params["arc_w"].T)
        arc_wt = arc_wt.astype(jnp.bfloat16)     # halves the dominant HBM->VMEM DMA

        label_col = label.reshape(B, 1).astype(jnp.int32)

        arc_kern = functools.partial(
            arc_margin_kernel,
            cos_m=math.cos(margin), sin_m=math.sin(margin),
            th=math.cos(math.pi - margin),
            mm=math.sin(math.pi - margin) * margin,
            scale=scale, tile_c=tile_c)

        logits_pad = pl.pallas_call(
            arc_kern,
            out_shape=jax.ShapeDtypeStruct((B, c_pad), jnp.float32),
            grid_spec=pltpu.PrefetchScalarGridSpec(
                num_scalar_prefetch=0, grid=(n_ct,),
                in_specs=[pl.BlockSpec((B, feat_pad), lambda c: (0, 0)),
                          pl.BlockSpec((B, 1), lambda c: (0, 0)),
                          pl.BlockSpec((feat_pad, tile_c), lambda c: (0, c))],
                out_specs=pl.BlockSpec((B, tile_c), lambda c: (0, c))),
            compiler_params=pltpu.CompilerParams(
                dimension_semantics=("parallel",)),     # shards across v7x's 2 TCs
        )(feats_n, label_col, arc_wt)
        return logits_pad[:, :n_classes]

    # ------------------------------------ eval ------------------------------------
    out_dim = Cbb + fc
    out_pad = _round_up(out_dim, 128)                       # lane-dense output, slice below
    txt_fc_b = params["text_fc_b"].reshape(1, fc)
    txt_bn_g = params["text_bn_g"].reshape(1, fc)
    txt_bn_b = params["text_bn_b"].reshape(1, fc)
    feat_inputs = [img, emb_cls, bb_w3, bb_b3, params["enc_w"], enc_b,
                   params["text_fc_w"], txt_fc_b, txt_bn_g, txt_bn_b]
    in_specs = [img_spec] + [_fs(a.shape) for a in feat_inputs[1:]]

    feats_pad = pl.pallas_call(
        functools.partial(shopee_eval_feature_kernel, inv_hw=1.0 / HW, out_pad=out_pad),
        out_shape=jax.ShapeDtypeStruct((B, out_pad), jnp.float32),
        grid_spec=pltpu.PrefetchScalarGridSpec(
            num_scalar_prefetch=0, grid=(n_hw,),
            in_specs=in_specs,
            out_specs=pl.BlockSpec((B, out_pad), lambda h: (0, 0)),
            scratch_shapes=[pltpu.VMEM((B, Cbb), jnp.float32)]),
        compiler_params=feat_cparams,
    )(*feat_inputs)
    return feats_pad[:, :out_dim]


# ---------------------------------- model setup ------------------------------------

def init_params(key, *, vocab=64, text_hidden=32, img_in_ch=3,
                img_backbone_ch=32, fc_dim=16, n_classes=10):
    ks = jax.random.split(key, 8)

    def xavier_uniform(k, shape):
        limit = math.sqrt(6.0 / (shape[0] + shape[1]))
        return jax.random.uniform(k, shape, jnp.float32, -limit, limit)

    def xavier_normal(k, shape):
        std = math.sqrt(2.0 / (shape[0] + shape[1]))
        return jax.random.normal(k, shape, jnp.float32) * std

    return {
        # text backbone stand-in (transformers.AutoModel replacement)
        "emb":        jax.random.normal(ks[0], (vocab, text_hidden), jnp.float32) * 0.02,
        "enc_w":      xavier_uniform(ks[1], (text_hidden, text_hidden)),
        "enc_b":      jnp.zeros((text_hidden,), jnp.float32),
        # image backbone stand-in (timm EfficientNet trunk replacement)
        "img_bb_w":   xavier_uniform(ks[2], (img_in_ch, img_backbone_ch)),
        "img_bb_b":   jnp.zeros((img_backbone_ch,), jnp.float32),
        # use_fc head (matches _init_params: xavier_normal weights, zero bias, BN g=1 b=0)
        "text_fc_w":  xavier_normal(ks[3], (text_hidden, fc_dim)),
        "text_fc_b":  jnp.zeros((fc_dim,), jnp.float32),
        "img_fc_w":   xavier_normal(ks[4], (img_backbone_ch, fc_dim)),
        "img_fc_b":   jnp.zeros((fc_dim,), jnp.float32),
        "text_bn_g":  jnp.ones((fc_dim,), jnp.float32),
        "text_bn_b":  jnp.zeros((fc_dim,), jnp.float32),
        "img_bn_g":   jnp.ones((fc_dim,), jnp.float32),
        "img_bn_b":   jnp.zeros((fc_dim,), jnp.float32),
        # ArcMarginProduct weight: (out_features, in_features) xavier_uniform
        "arc_w":      xavier_uniform(ks[5], (n_classes, 2 * fc_dim)),
    }


# --------------------------- pure-JAX sanity reference -----------------------------

def reference_forward(params, input_ids, image, label, training, scale, margin):
    """Independent pure-JAX mirror of the module semantics (same stand-in backbones,
    same bf16-quantized ArcMargin weight); used only as an in-script sanity check."""
    B, Cin, H, W = image.shape
    img = image.reshape(B, Cin, H * W).astype(jnp.float32)
    y = jnp.einsum("bip,ij->bjp", img, params["img_bb_w"]) + params["img_bb_b"][None, :, None]
    img_feat = jnp.mean(jnp.maximum(y, 0.0), axis=-1)
    emb_cls = params["emb"][input_ids[:, 0]]
    txt = jnp.tanh(emb_cls @ params["enc_w"] + params["enc_b"])

    def lin_bn(x, w, b, g, beta, relu):
        h = x @ w + b
        mu = h.mean(0, keepdims=True)
        var = ((h - mu) ** 2).mean(0, keepdims=True)
        out = (h - mu) * jax.lax.rsqrt(var + 1e-5) * g + beta
        return jnp.maximum(out, 0.0) if relu else out

    txt_f = lin_bn(txt, params["text_fc_w"], params["text_fc_b"],
                   params["text_bn_g"], params["text_bn_b"], True)
    if not training:
        return jnp.concatenate([img_feat, txt_f], axis=-1)
    img_f = lin_bn(img_feat, params["img_fc_w"], params["img_fc_b"],
                   params["img_bn_g"], params["img_bn_b"], False)
    feats = jnp.concatenate([img_f, txt_f], axis=-1)

    wq = params["arc_w"].astype(jnp.bfloat16).astype(jnp.float32)
    w_inv = jax.lax.rsqrt(jnp.maximum(jnp.sum(wq * wq, axis=1), 1e-24))
    x_inv = jax.lax.rsqrt(jnp.maximum(jnp.sum(feats * feats, axis=-1, keepdims=True), 1e-24))
    cosine = jnp.dot((feats * x_inv).astype(jnp.bfloat16), wq.astype(jnp.bfloat16).T,
                     preferred_element_type=jnp.float32) * w_inv[None, :]
    sine = jnp.sqrt(jnp.maximum(1.0 - cosine ** 2, 0.0))
    cos_m, sin_m = math.cos(margin), math.sin(margin)
    th = math.cos(math.pi - margin)
    mm = math.sin(math.pi - margin) * margin
    phi = jnp.where(cosine > th, cosine * cos_m - sine * sin_m, cosine - mm)
    onehot = jax.nn.one_hot(label, cosine.shape[1], dtype=jnp.float32)
    return (onehot * phi + (1.0 - onehot) * cosine) * scale


# ------------------------------------- main ----------------------------------------

if __name__ == "__main__":
    key = jax.random.PRNGKey(0)
    kp, ki, kimg, klbl = jax.random.split(key, 4)

    B, S = 4, 8
    vocab, n_classes = 64, 300

    params = init_params(kp, vocab=vocab, text_hidden=32, img_in_ch=3,
                         img_backbone_ch=32, fc_dim=16, n_classes=n_classes)

    input_ids = jax.random.randint(ki, (B, S), 0, vocab, dtype=jnp.int32)
    attention_mask = jnp.ones((B, S), jnp.int32)   # unused by the stand-in encoder
    image = jax.random.normal(kimg, (B, 3, 32, 32), jnp.float32)     # NCHW, HW=1024
    label = jax.random.randint(klbl, (B,), 0, n_classes, dtype=jnp.int32)

    # Small tiles on purpose so the HW-accumulation (2 steps) and class-tiling (3 tiles)
    # paths are exercised; real deployments use the defaults (~2048).
    logits = shopee_forward(params, input_ids, attention_mask, image, label,
                            training=True, scale=30.0, margin=0.5,
                            class_tile=128, hw_tile_cap=512)
    logits = jax.block_until_ready(logits)
    assert logits.shape == (B, n_classes)

    feats = shopee_forward(params, input_ids, attention_mask, image, label,
                           training=False, scale=30.0, margin=0.5,
                           class_tile=128, hw_tile_cap=512)
    feats = jax.block_until_ready(feats)
    assert feats.shape == (B, 32 + 16)   # img(32, no fc/bn in eval) + text(16)

    # sanity check against the independent pure-JAX reference (loose tolerances absorb
    # bf16 matmul rounding / XLA-vs-Mosaic f32 precision differences; structural bugs
    # would be orders of magnitude larger)
    ref_logits = reference_forward(params, input_ids, image, label, True, 30.0, 0.5)
    ref_feats = reference_forward(params, input_ids, image, label, False, 30.0, 0.5)
    assert bool(jnp.isfinite(logits).all()) and bool(jnp.isfinite(feats).all())
    assert float(jnp.max(jnp.abs(logits - ref_logits))) < 1.0   # logits are O(scale=30)
    assert float(jnp.max(jnp.abs(feats - ref_feats))) < 0.08

    print("KERNEL_OK")
</pallas_src>

<mosaic_0001>
module attributes {stable_mosaic.version = 11 : i64} {
  func.func @shopee_train_feature_kernel(%arg0: i32, %arg1: memref<4x3x512xf32, #tpu.memory_space<vmem>>, %arg2: memref<4x32xf32, #tpu.memory_space<vmem>>, %arg3: memref<3x32x1xf32, #tpu.memory_space<vmem>>, %arg4: memref<1x32x1xf32, #tpu.memory_space<vmem>>, %arg5: memref<32x32xf32, #tpu.memory_space<vmem>>, %arg6: memref<1x32xf32, #tpu.memory_space<vmem>>, %arg7: memref<64x32xf32, #tpu.memory_space<vmem>>, %arg8: memref<1x32xf32, #tpu.memory_space<vmem>>, %arg9: memref<1x32xf32, #tpu.memory_space<vmem>>, %arg10: memref<1x32xf32, #tpu.memory_space<vmem>>, %arg11: memref<4x128xf32, #tpu.memory_space<vmem>>, %arg12: memref<4x32xf32, #tpu.memory_space<vmem>>) attributes {dimension_semantics = [#tpu.dimension_semantics<arbitrary>], iteration_bounds = array<i64: 2>, scalar_prefetch = 0 : i64, scratch_operands = 1 : i64, tpu.core_type = #tpu.core_type<tc>, window_params = [{transform_indices = @transform_0, window_bounds = array<i64: 4, 3, 512>}, {pipeline_mode = #tpu.pipeline_mode<synchronous>, transform_indices = @transform_1, window_bounds = array<i64: 4, 32>}, {pipeline_mode = #tpu.pipeline_mode<synchronous>, transform_indices = @transform_2, window_bounds = array<i64: 3, 32, 1>}, {pipeline_mode = #tpu.pipeline_mode<synchronous>, transform_indices = @transform_3, window_bounds = array<i64: 1, 32, 1>}, {pipeline_mode = #tpu.pipeline_mode<synchronous>, transform_indices = @transform_4, window_bounds = array<i64: 32, 32>}, {pipeline_mode = #tpu.pipeline_mode<synchronous>, transform_indices = @transform_5, window_bounds = array<i64: 1, 32>}, {pipeline_mode = #tpu.pipeline_mode<synchronous>, transform_indices = @transform_6, window_bounds = array<i64: 64, 32>}, {pipeline_mode = #tpu.pipeline_mode<synchronous>, transform_indices = @transform_7, window_bounds = array<i64: 1, 32>}, {pipeline_mode = #tpu.pipeline_mode<synchronous>, transform_indices = @transform_8, window_bounds = array<i64: 1, 32>}, {pipeline_mode = #tpu.pipeline_mode<synchronous>, transform_indices = @transform_9, window_bounds = array<i64: 1, 32>}, {pipeline_mode = #tpu.pipeline_mode<synchronous>, transform_indices = @transform_10, window_bounds = array<i64: 4, 128>}]} {
    %c0_i32 = arith.constant 0 : i32
    %0 = arith.cmpi eq, %arg0, %c0_i32 : i32
    %1 = arith.extui %0 : i1 to i32
    %c0_i32_0 = arith.constant 0 : i32
    %2 = arith.cmpi ne, %1, %c0_i32_0 : i32
    scf.if %2 {
      %cst_15 = arith.constant 0.000000e+00 : f32
      %34 = vector.broadcast %cst_15 : f32 to vector<4x32xf32>
      %c0_16 = arith.constant 0 : index
      %c0_17 = arith.constant 0 : index
      %35 = vector.load %arg12[%c0_16, %c0_17] : memref<4x32xf32, #tpu.memory_space<vmem>>, vector<4x32xf32>
      tpu.vector_store %arg12[%c0_16, %c0_17], %34 {strides = array<i32>} : memref<4x32xf32, #tpu.memory_space<vmem>>, vector<4x32xf32>,
    } else {
    }
    %c0 = arith.constant 0 : index
    %c0_1 = arith.constant 0 : index
    %3 = vector.load %arg12[%c0, %c0_1] : memref<4x32xf32, #tpu.memory_space<vmem>>, vector<4x32xf32>
    %c0_2 = arith.constant 0 : index
    %c0_3 = arith.constant 0 : index
    %c0_4 = arith.constant 0 : index
    %4 = vector.load %arg1[%c0_2, %c0_3, %c0_4] : memref<4x3x512xf32, #tpu.memory_space<vmem>>, vector<4x3x512xf32>
    %c0_5 = arith.constant 0 : index
    %c0_6 = arith.constant 0 : index
    %c0_7 = arith.constant 0 : index
    %5 = vector.load %arg3[%c0_5, %c0_6, %c0_7] : memref<3x32x1xf32, #tpu.memory_space<vmem>>, vector<3x32x1xf32>
    %c0_8 = arith.constant 0 : index
    %c0_9 = arith.constant 0 : index
    %c0_10 = arith.constant 0 : index
    %6 = vector.load %arg4[%c0_8, %c0_9, %c0_10] : memref<1x32x1xf32, #tpu.memory_space<vmem>>, vector<1x32x1xf32>
    %7 = vector.extract_strided_slice %4 {offsets = [0, 0, 0], sizes = [4, 1, 512], strides = [1, 1, 1]} : vector<4x3x512xf32> to vector<4x1x512xf32>
    %8 = vector.extract_strided_slice %5 {offsets = [0, 0, 0], sizes = [1, 32, 1], strides = [1, 1, 1]} : vector<3x32x1xf32> to vector<1x32x1xf32>
    %9 = vector.broadcast %7 : vector<4x1x512xf32> to vector<4x32x512xf32>
    %10 = vector.broadcast %8 : vector<1x32x1xf32> to vector<4x32x512xf32>
    %11 = arith.mulf %9, %10 : vector<4x32x512xf32>
    %12 = vector.extract_strided_slice %4 {offsets = [0, 1, 0], sizes = [4, 1, 512], strides = [1, 1, 1]} : vector<4x3x512xf32> to vector<4x1x512xf32>
    %13 = vector.extract_strided_slice %5 {offsets = [1, 0, 0], sizes = [1, 32, 1], strides = [1, 1, 1]} : vector<3x32x1xf32> to vector<1x32x1xf32>
    %14 = vector.broadcast %12 : vector<4x1x512xf32> to vector<4x32x512xf32>
    %15 = vector.broadcast %13 : vector<1x32x1xf32> to vector<4x32x512xf32>
    %16 = arith.mulf %14, %15 : vector<4x32x512xf32>
    %17 = arith.addf %11, %16 : vector<4x32x512xf32>
    %18 = vector.extract_strided_slice %4 {offsets = [0, 2, 0], sizes = [4, 1, 512], strides = [1, 1, 1]} : vector<4x3x512xf32> to vector<4x1x512xf32>
    %19 = vector.extract_strided_slice %5 {offsets = [2, 0, 0], sizes = [1, 32, 1], strides = [1, 1, 1]} : vector<3x32x1xf32> to vector<1x32x1xf32>
    %20 = vector.broadcast %18 : vector<4x1x512xf32> to vector<4x32x512xf32>
    %21 = vector.broadcast %19 : vector<1x32x1xf32> to vector<4x32x512xf32>
    %22 = arith.mulf %20, %21 : vector<4x32x512xf32>
    %23 = arith.addf %17, %22 : vector<4x32x512xf32>
    %24 = vector.broadcast %6 : vector<1x32x1xf32> to vector<4x32x512xf32>
    %25 = arith.addf %23, %24 : vector<4x32x512xf32>
    %cst = arith.constant 0.000000e+00 : f32
    %26 = vector.broadcast %cst : f32 to vector<4x32x512xf32>
    %27 = arith.maximumf %25, %26 : vector<4x32x512xf32>
    %cst_11 = arith.constant dense<0.000000e+00> : vector<4x32xf32>
    %28 = vector.multi_reduction <add>, %27, %cst_11 [2] : vector<4x32x512xf32> to vector<4x32xf32>
    %29 = arith.addf %3, %28 : vector<4x32xf32>
    %c0_12 = arith.constant 0 : index
    %c0_13 = arith.constant 0 : index
    %30 = vector.load %arg12[%c0_12, %c0_13] : memref<4x32xf32, #tpu.memory_space<vmem>>, vector<4x32xf32>
    tpu.vector_store %arg12[%c0_12, %c0_13], %29 {strides = array<i32>} : memref<4x32xf32, #tpu.memory_space<vmem>>, vector<4x32xf32>,
    %c1_i32 = arith.constant 1 : i32
    %31 = arith.cmpi eq, %arg0, %c1_i32 : i32
    %32 = arith.extui %31 : i1 to i32
    %c0_i32_14 = arith.constant 0 : i32
    %33 = arith.cmpi ne, %32, %c0_i32_14 : i32
    scf.if %33 {
      %c0_15 = arith.constant 0 : index
      %c0_16 = arith.constant 0 : index
      %34 = vector.load %arg12[%c0_15, %c0_16] : memref<4x32xf32, #tpu.memory_space<vmem>>, vector<4x32xf32>
      %cst_17 = arith.constant 9.765625E-4 : f32
      %35 = vector.broadcast %cst_17 : f32 to vector<4x32xf32>
      %36 = arith.mulf %34, %35 : vector<4x32xf32>
      %c0_18 = arith.constant 0 : index
      %c0_19 = arith.constant 0 : index
      %37 = vector.load %arg2[%c0_18, %c0_19] : memref<4x32xf32, #tpu.memory_space<vmem>>, vector<4x32xf32>
      %c0_20 = arith.constant 0 : index
      %c0_21 = arith.constant 0 : index
      %38 = vector.load %arg5[%c0_20, %c0_21] : memref<32x32xf32, #tpu.memory_space<vmem>>, vector<32x32xf32>
      %c0_22 = arith.constant 0 : index
      %c0_23 = arith.constant 0 : index
      %39 = vector.load %arg6[%c0_22, %c0_23] : memref<1x32xf32, #tpu.memory_space<vmem>>, vector<1x32xf32>
      %cst_24 = arith.constant dense<0.000000e+00> : vector<4x32xf32>
      %40 = tpu.matmul %37, %38, %cst_24 {dimension_numbers = #tpu.dot_dimension_numbers<[1], [0], [0], [1], [0, 0, 1, 1], [], []>} : vector<4x32xf32>, vector<32x32xf32>, vector<4x32xf32> -> vector<4x32xf32>
      %41 = vector.broadcast %39 : vector<1x32xf32> to vector<4x32xf32>
      %42 = arith.addf %40, %41 : vector<4x32xf32>
      %43 = math.tanh %42 : vector<4x32xf32>
      %44 = tpu.concatenate %36, %43 in 1 : vector<4x32xf32>, vector<4x32xf32> -> vector<4x64xf32>
      %c0_25 = arith.constant 0 : index
      %c0_26 = arith.constant 0 : index
      %45 = vector.load %arg7[%c0_25, %c0_26] : memref<64x32xf32, #tpu.memory_space<vmem>>, vector<64x32xf32>
      %cst_27 = arith.constant dense<0.000000e+00> : vector<4x32xf32>
      %46 = tpu.matmul %44, %45, %cst_27 {dimension_numbers = #tpu.dot_dimension_numbers<[1], [0], [0], [1], [0, 0, 1, 1], [], []>} : vector<4x64xf32>, vector<64x32xf32>, vector<4x32xf32> -> vector<4x32xf32>
      %c0_28 = arith.constant 0 : index
      %c0_29 = arith.constant 0 : index
      %47 = vector.load %arg8[%c0_28, %c0_29] : memref<1x32xf32, #tpu.memory_space<vmem>>, vector<1x32xf32>
      %48 = vector.broadcast %47 : vector<1x32xf32> to vector<4x32xf32>
      %49 = arith.addf %46, %48 : vector<4x32xf32>
      %cst_30 = arith.constant dense<0.000000e+00> : vector<32xf32>
      %50 = vector.multi_reduction <add>, %49, %cst_30 [0] : vector<4x32xf32> to vector<32xf32>
      %51 = vector.shape_cast %50 : vector<32xf32> to vector<1x32xf32>
      %cst_31 = arith.constant 4.000000e+00 : f32
      %52 = vector.broadcast %cst_31 : f32 to vector<1x32xf32>
      %53 = arith.divf %51, %52 : vector<1x32xf32>
      %54 = vector.broadcast %53 : vector<1x32xf32> to vector<4x32xf32>
      %55 = arith.subf %49, %54 : vector<4x32xf32>
      %56 = arith.mulf %55, %55 : vector<4x32xf32>
      %cst_32 = arith.constant dense<0.000000e+00> : vector<32xf32>
      %57 = vector.multi_reduction <add>, %56, %cst_32 [0] : vector<4x32xf32> to vector<32xf32>
      %58 = vector.shape_cast %57 : vector<32xf32> to vector<1x32xf32>
      %cst_33 = arith.constant 4.000000e+00 : f32
      %59 = vector.broadcast %cst_33 : f32 to vector<1x32xf32>
      %60 = arith.divf %58, %59 : vector<1x32xf32>
      %61 = vector.broadcast %53 : vector<1x32xf32> to vector<4x32xf32>
      %62 = arith.subf %49, %61 : vector<4x32xf32>
      %cst_34 = arith.constant 9.99999974E-6 : f32
      %63 = vector.broadcast %cst_34 : f32 to vector<1x32xf32>
      %64 = arith.addf %60, %63 : vector<1x32xf32>
      %65 = math.rsqrt %64 : vector<1x32xf32>
      %66 = vector.broadcast %65 : vector<1x32xf32> to vector<4x32xf32>
      %67 = arith.mulf %62, %66 : vector<4x32xf32>
      %c0_35 = arith.constant 0 : index
      %c0_36 = arith.constant 0 : index
      %68 = vector.load %arg9[%c0_35, %c0_36] : memref<1x32xf32, #tpu.memory_space<vmem>>, vector<1x32xf32>
      %69 = vector.broadcast %68 : vector<1x32xf32> to vector<4x32xf32>
      %70 = arith.mulf %67, %69 : vector<4x32xf32>
      %c0_37 = arith.constant 0 : index
      %c0_38 = arith.constant 0 : index
      %71 = vector.load %arg10[%c0_37, %c0_38] : memref<1x32xf32, #tpu.memory_space<vmem>>, vector<1x32xf32>
      %72 = vector.broadcast %71 : vector<1x32xf32> to vector<4x32xf32>
      %73 = arith.addf %70, %72 : vector<4x32xf32>
      %74 = tpu.iota {dimensions = array<i32: 1>} : vector<4x32xi32>
      %c16_i32 = arith.constant 16 : i32
      %75 = vector.broadcast %c16_i32 : i32 to vector<4x32xi32>
      %76 = arith.cmpi sge, %74, %75 : vector<4x32xi32>
      %cst_39 = arith.constant 0.000000e+00 : f32
      %77 = vector.broadcast %cst_39 : f32 to vector<4x32xf32>
      %78 = arith.maximumf %73, %77 : vector<4x32xf32>
      %79 = arith.select %76, %78, %73 : vector<4x32xi1>, vector<4x32xf32>
      %80 = arith.mulf %79, %79 : vector<4x32xf32>
      %cst_40 = arith.constant dense<0.000000e+00> : vector<4xf32>
      %81 = vector.multi_reduction <add>, %80, %cst_40 [1] : vector<4x32xf32> to vector<4xf32>
      %82 = vector.shape_cast %81 : vector<4xf32> to vector<4x1xf32>
      %cst_41 = arith.constant 1.000000e-24 : f32
      %83 = vector.broadcast %cst_41 : f32 to vector<4x1xf32>
      %84 = arith.maximumf %82, %83 : vector<4x1xf32>
      %85 = math.rsqrt %84 : vector<4x1xf32>
      %86 = vector.broadcast %85 : vector<4x1xf32> to vector<4x32xf32>
      %87 = arith.mulf %79, %86 : vector<4x32xf32>
      %cst_42 = arith.constant 0.000000e+00 : f32
      %88 = vector.broadcast %cst_42 : f32 to vector<4x96xf32>
      %89 = tpu.concatenate %87, %88 in 1 : vector<4x32xf32>, vector<4x96xf32> -> vector<4x128xf32>
      %c0_43 = arith.constant 0 : index
      %c0_44 = arith.constant 0 : index
      %90 = vector.load %arg11[%c0_43, %c0_44] : memref<4x128xf32, #tpu.memory_space<vmem>>, vector<4x128xf32>
      tpu.vector_store %arg11[%c0_43, %c0_44], %89 {strides = array<i32>} : memref<4x128xf32, #tpu.memory_space<vmem>>, vector<4x128xf32>,
    } else {
    }
    return
  }
  func.func @transform_0(%arg0: i32) -> (i32, i32, i32) {
    %c0_i32 = arith.constant 0 : i32
    %c0_i32_0 = arith.constant 0 : i32
    %c0_i32_1 = arith.constant 0 : i32
    return %c0_i32, %c0_i32_0, %arg0 : i32, i32, i32
  }
  func.func @transform_1(%arg0: i32) -> (i32, i32) {
    %c0_i32 = arith.constant 0 : i32
    %c0_i32_0 = arith.constant 0 : i32
    %c0_i32_1 = arith.constant 0 : i32
    return %c0_i32, %c0_i32_0 : i32, i32
  }
  func.func @transform_2(%arg0: i32) -> (i32, i32, i32) {
    %c0_i32 = arith.constant 0 : i32
    %c0_i32_0 = arith.constant 0 : i32
    %c0_i32_1 = arith.constant 0 : i32
    %c0_i32_2 = arith.constant 0 : i32
    return %c0_i32, %c0_i32_0, %c0_i32_1 : i32, i32, i32
  }
  func.func @transform_3(%arg0: i32) -> (i32, i32, i32) {
    %c0_i32 = arith.constant 0 : i32
    %c0_i32_0 = arith.constant 0 : i32
    %c0_i32_1 = arith.constant 0 : i32
    %c0_i32_2 = arith.constant 0 : i32
    return %c0_i32, %c0_i32_0, %c0_i32_1 : i32, i32, i32
  }
  func.func @transform_4(%arg0: i32) -> (i32, i32) {
    %c0_i32 = arith.constant 0 : i32
    %c0_i32_0 = arith.constant 0 : i32
    %c0_i32_1 = arith.constant 0 : i32
    return %c0_i32, %c0_i32_0 : i32, i32
  }
  func.func @transform_5(%arg0: i32) -> (i32, i32) {
    %c0_i32 = arith.constant 0 : i32
    %c0_i32_0 = arith.constant 0 : i32
    %c0_i32_1 = arith.constant 0 : i32
    return %c0_i32, %c0_i32_0 : i32, i32
  }
  func.func @transform_6(%arg0: i32) -> (i32, i32) {
    %c0_i32 = arith.constant 0 : i32
    %c0_i32_0 = arith.constant 0 : i32
    %c0_i32_1 = arith.constant 0 : i32
    return %c0_i32, %c0_i32_0 : i32, i32
  }
  func.func @transform_7(%arg0: i32) -> (i32, i32) {
    %c0_i32 = arith.constant 0 : i32
    %c0_i32_0 = arith.constant 0 : i32
    %c0_i32_1 = arith.constant 0 : i32
    return %c0_i32, %c0_i32_0 : i32, i32
  }
  func.func @transform_8(%arg0: i32) -> (i32, i32) {
    %c0_i32 = arith.constant 0 : i32
    %c0_i32_0 = arith.constant 0 : i32
    %c0_i32_1 = arith.constant 0 : i32
    return %c0_i32, %c0_i32_0 : i32, i32
  }
  func.func @transform_9(%arg0: i32) -> (i32, i32) {
    %c0_i32 = arith.constant 0 : i32
    %c0_i32_0 = arith.constant 0 : i32
    %c0_i32_1 = arith.constant 0 : i32
    return %c0_i32, %c0_i32_0 : i32, i32
  }
  func.func @transform_10(%arg0: i32) -> (i32, i32) {
    %c0_i32 = arith.constant 0 : i32
    %c0_i32_0 = arith.constant 0 : i32
    %c0_i32_1 = arith.constant 0 : i32
    return %c0_i32, %c0_i32_0 : i32, i32
  }
}

module attributes {stable_mosaic.version = 11 : i64} {
  func.func @arc_margin_kernel(%arg0: i32, %arg1: memref<4x128xf32, #tpu.memory_space<vmem>>, %arg2: memref<4x1xi32, #tpu.memory_space<vmem>>, %arg3: memref<128x128xbf16, #tpu.memory_space<vmem>>, %arg4: memref<4x128xf32, #tpu.memory_space<vmem>>) attributes {dimension_semantics = [#tpu.dimension_semantics<parallel>], iteration_bounds = array<i64: 3>, scalar_prefetch = 0 : i64, scratch_operands = 0 : i64, tpu.core_type = #tpu.core_type<tc>, window_params = [{pipeline_mode = #tpu.pipeline_mode<synchronous>, transform_indices = @transform_0, window_bounds = array<i64: 4, 128>}, {pipeline_mode = #tpu.pipeline_mode<synchronous>, transform_indices = @transform_1, window_bounds = array<i64: 4, 1>}, {transform_indices = @transform_2, window_bounds = array<i64: 128, 128>}, {transform_indices = @transform_3, window_bounds = array<i64: 4, 128>}]} {
    %c0 = arith.constant 0 : index
    %c0_0 = arith.constant 0 : index
    %0 = vector.load %arg3[%c0, %c0_0] : memref<128x128xbf16, #tpu.memory_space<vmem>>, vector<128x128xbf16>
    %1 = arith.extf %0 : vector<128x128xbf16> to vector<128x128xf32>
    %2 = arith.mulf %1, %1 : vector<128x128xf32>
    %cst = arith.constant dense<0.000000e+00> : vector<128xf32>
    %3 = vector.multi_reduction <add>, %2, %cst [0] : vector<128x128xf32> to vector<128xf32>
    %4 = vector.shape_cast %3 : vector<128xf32> to vector<1x128xf32>
    %cst_1 = arith.constant 1.000000e-24 : f32
    %5 = vector.broadcast %cst_1 : f32 to vector<1x128xf32>
    %6 = arith.maximumf %4, %5 : vector<1x128xf32>
    %7 = math.rsqrt %6 : vector<1x128xf32>
    %c0_2 = arith.constant 0 : index
    %c0_3 = arith.constant 0 : index
    %8 = vector.load %arg1[%c0_2, %c0_3] : memref<4x128xf32, #tpu.memory_space<vmem>>, vector<4x128xf32>
    %9 = arith.truncf %8 : vector<4x128xf32> to vector<4x128xbf16>
    %cst_4 = arith.constant dense<0.000000e+00> : vector<4x128xf32>
    %10 = tpu.matmul %9, %0, %cst_4 {dimension_numbers = #tpu.dot_dimension_numbers<[1], [0], [0], [1], [0, 0, 1, 1], [], []>} : vector<4x128xbf16>, vector<128x128xbf16>, vector<4x128xf32> -> vector<4x128xf32>
    %11 = vector.broadcast %7 : vector<1x128xf32> to vector<4x128xf32>
    %12 = arith.mulf %10, %11 : vector<4x128xf32>
    %13 = tpu.iota {dimensions = array<i32: 1>} : vector<4x128xi32>
    %c128_i32 = arith.constant 128 : i32
    %14 = arith.muli %arg0, %c128_i32 : i32
    %15 = vector.broadcast %14 : i32 to vector<4x128xi32>
    %16 = arith.addi %13, %15 : vector<4x128xi32>
    %c0_5 = arith.constant 0 : index
    %c0_6 = arith.constant 0 : index
    %17 = vector.load %arg2[%c0_5, %c0_6] : memref<4x1xi32, #tpu.memory_space<vmem>>, vector<4x1xi32>
    %18 = vector.broadcast %17 : vector<4x1xi32> to vector<4x128xi32>
    %19 = arith.cmpi eq, %16, %18 : vector<4x128xi32>
    %20 = arith.extui %19 : vector<4x128xi1> to vector<4x128xi32>
    %21 = arith.sitofp %20 : vector<4x128xi32> to vector<4x128xf32>
    %22 = arith.mulf %12, %21 : vector<4x128xf32>
    %cst_7 = arith.constant dense<0.000000e+00> : vector<4xf32>
    %23 = vector.multi_reduction <add>, %22, %cst_7 [1] : vector<4x128xf32> to vector<4xf32>
    %24 = vector.shape_cast %23 : vector<4xf32> to vector<4x1xf32>
    %25 = arith.mulf %24, %24 : vector<4x1xf32>
    %cst_8 = arith.constant 1.000000e+00 : f32
    %26 = vector.broadcast %cst_8 : f32 to vector<4x1xf32>
    %27 = arith.subf %26, %25 : vector<4x1xf32>
    %cst_9 = arith.constant 0.000000e+00 : f32
    %28 = vector.broadcast %cst_9 : f32 to vector<4x1xf32>
    %29 = arith.maximumf %27, %28 : vector<4x1xf32>
    %30 = math.sqrt %29 : vector<4x1xf32>
    %cst_10 = arith.constant 0.87758255 : f32
    %31 = vector.broadcast %cst_10 : f32 to vector<4x1xf32>
    %32 = arith.mulf %24, %31 : vector<4x1xf32>
    %cst_11 = arith.constant 0.47942555 : f32
    %33 = vector.broadcast %cst_11 : f32 to vector<4x1xf32>
    %34 = arith.mulf %30, %33 : vector<4x1xf32>
    %35 = arith.subf %32, %34 : vector<4x1xf32>
    %cst_12 = arith.constant -0.87758255 : f32
    %36 = vector.broadcast %cst_12 : f32 to vector<4x1xf32>
    %37 = arith.cmpf ogt, %24, %36 : vector<4x1xf32>
    %cst_13 = arith.constant 0.239712775 : f32
    %38 = vector.broadcast %cst_13 : f32 to vector<4x1xf32>
    %39 = arith.subf %24, %38 : vector<4x1xf32>
    %40 = arith.select %37, %35, %39 : vector<4x1xi1>, vector<4x1xf32>
    %41 = arith.subf %40, %24 : vector<4x1xf32>
    %42 = vector.broadcast %41 : vector<4x1xf32> to vector<4x128xf32>
    %43 = arith.mulf %21, %42 : vector<4x128xf32>
    %44 = arith.addf %12, %43 : vector<4x128xf32>
    %cst_14 = arith.constant 3.000000e+01 : f32
    %45 = vector.broadcast %cst_14 : f32 to vector<4x128xf32>
    %46 = arith.mulf %44, %45 : vector<4x128xf32>
    %c0_15 = arith.constant 0 : index
    %c0_16 = arith.constant 0 : index
    %47 = vector.load %arg4[%c0_15, %c0_16] : memref<4x128xf32, #tpu.memory_space<vmem>>, vector<4x128xf32>
    tpu.vector_store %arg4[%c0_15, %c0_16], %46 {strides = array<i32>} : memref<4x128xf32, #tpu.memory_space<vmem>>, vector<4x128xf32>,
    return
  }
  func.func @transform_0(%arg0: i32) -> (i32, i32) {
    %c0_i32 = arith.constant 0 : i32
    %c0_i32_0 = arith.constant 0 : i32
    %c0_i32_1 = arith.constant 0 : i32
    return %c0_i32, %c0_i32_0 : i32, i32
  }
  func.func @transform_1(%arg0: i32) -> (i32, i32) {
    %c0_i32 = arith.constant 0 : i32
    %c0_i32_0 = arith.constant 0 : i32
    %c0_i32_1 = arith.constant 0 : i32
    return %c0_i32, %c0_i32_0 : i32, i32
  }
  func.func @transform_2(%arg0: i32) -> (i32, i32) {
    %c0_i32 = arith.constant 0 : i32
    %c0_i32_0 = arith.constant 0 : i32
    return %c0_i32, %arg0 : i32, i32
  }
  func.func @transform_3(%arg0: i32) -> (i32, i32) {
    %c0_i32 = arith.constant 0 : i32
    %c0_i32_0 = arith.constant 0 : i32
    return %c0_i32, %arg0 : i32, i32
  }
}

</mosaic_0001>

<llo_original>
// kernel: shopee_forward.3
$region0: #{shopee_forward.3}
  #allocation0 [shape = 'u32[]', space=smem, size = 0x4, offset = 0x4, fixed_abs, tag = 'smem constant byte address 0x4 - core index']
  #allocation1 [shape = 'u32[144,128]{1,0:T(1,128)}', space=vmem, size = 0x12000, scoped, tag = 'internal scratch']
  %s0 = inlined_call_operand.vmem [shape: f32[4,128], index: 0, kind: input, shape index: {}]
  %s1 = inlined_call_operand.vmem [shape: s32[4,1], index: 1, kind: input, shape index: {}]
  %s2 = inlined_call_operand.vmem [shape: bf16[128,384], index: 2, kind: input, shape index: {}]
  %s3 = inlined_call_operand.hbm [shape: f32[4,384], index: 3, kind: output, shape index: {}]
  %s4 = sld [smem:[#allocation0]]
  $region86: #{shopee_forward.3} parent=0
    _
  %s6 = ssub.s32 1, %s4
  %s7 = scalar_select 0, %s6, %s4
  $region1: #{shopee_forward.3} parent=0
    #allocation2 [shape = 'u8[65536]{0}', space=vmem, size = 0x10000, scoped, tag = 'input window, operand 2']
    #allocation3 [shape = 'u8[4096]{0}', space=vmem, size = 0x1000, scoped, tag = 'output window, operand 0']
    #allocation4 [shape = 's32[2]{0}', space=sflag, size = 0x8, scoped, tag = 'scoped memory for shopee_forward.3']
    %8 = vsyncpa [#allocation4], 0
    %s9 = scalar_lea.sflag [#allocation4], 1
    %10 = vsyncpa %s9, 0
    loop: start=0, step=1, limit=5
    $region2: #{shopee_forward.3} parent=1 // loop_pre_header
      _
    $region3: #{shopee_forward.3} parent=1 // loop_header
      %s12 = sphi 0, %s16
      %p13 = scmp.ge.s32.totalorder %s12, 5
      %s20 = sphi 0, %s20
      %s22 = sphi 0, %s20
      %s23 = sphi 0, %s22
      %s37 = sphi 0, %s23
      %s41 = sphi 0, %s41
      %s43 = sphi 0, %s41
      %s44 = sphi 0, %s43
      %s58 = sphi 0, %s44
      %s64 = sphi 0, %s66
      %s67 = sphi 0, %s64
      %s68 = sphi 0, %s67
      %s84 = sphi 0, %s68
      %s90 = sphi 0, %s92
      %s93 = sphi 0, %s90
      %s94 = sphi 0, %s93
      %s110 = sphi 0, %s94
    $region4: #{shopee_forward.3} parent=1 // loop_header_branch
      %15 = sbr.rel (%p13) target = $region8
    $region5: #{shopee_forward.3} parent=1 // loop_body
      %s17 = ssub.s32 %s12, 1
      %s18 = ssub.s32 %s12, 2
      %s19 = sadd.s32 %s12, 1
      %s21 = sadd.s32 %s20, 1
      %p24 = scmp.eq.s32.totalorder %s12, 2
      %p25 = scmp.ne.s32.totalorder %s20, %s22
      %p26 = scmp.eq.s32.totalorder %s12, 0
      %p27 = por %p25, %p26
      %p28 = scmp.ne.s32.totalorder %s20, %s22
      %p29 = scmp.eq.s32.totalorder %s17, 2
      %p30 = por %p28, %p29
      %p31 = scmp.ne.s32.totalorder %s22, %s23
      %p32 = scmp.eq.s32.totalorder %s17, 0
      %p33 = por %p31, %p32
      %p34 = scmp.ne.s32.totalorder %s22, %s23
      %p35 = scmp.eq.s32.totalorder %s18, 2
      %p36 = por %p34, %p35
      %p38 = scmp.ne.s32.totalorder %s23, %s37
      %p39 = scmp.eq.s32.totalorder %s18, 0
      %p40 = por %p38, %p39
      %s42 = sadd.s32 %s41, 1
      %p45 = scmp.eq.s32.totalorder %s12, 2
      %p46 = scmp.ne.s32.totalorder %s41, %s43
      %p47 = scmp.eq.s32.totalorder %s12, 0
      %p48 = por %p46, %p47
      %p49 = scmp.ne.s32.totalorder %s41, %s43
      %p50 = scmp.eq.s32.totalorder %s17, 2
      %p51 = por %p49, %p50
      %p52 = scmp.ne.s32.totalorder %s43, %s44
      %p53 = scmp.eq.s32.totalorder %s17, 0
      %p54 = por %p52, %p53
      %p55 = scmp.ne.s32.totalorder %s43, %s44
      %p56 = scmp.eq.s32.totalorder %s18, 2
      %p57 = por %p55, %p56
      %p59 = scmp.ne.s32.totalorder %s44, %s58
      %p60 = scmp.eq.s32.totalorder %s18, 0
      %p61 = por %p59, %p60
      %s62 = ssub.s32 %s12, %s19
      %p63 = scmp.eq.s32.totalorder %s62, 0
      %s65 = sadd.s32 %s64, 1
      %s66 = scalar_select %p63, %s64, %s65
      %p69 = pneg %p63
      %p70 = scmp.eq.s32.totalorder %s12, 2
      %p71 = por %p69, %p70
      %p72 = scmp.ne.s32.totalorder %s64, %s67
      %p73 = scmp.eq.s32.totalorder %s12, 0
      %p74 = por %p72, %p73
      %p75 = scmp.ne.s32.totalorder %s64, %s67
      %p76 = scmp.eq.s32.totalorder %s17, 2
      %p77 = por %p75, %p76
      %p78 = scmp.ne.s32.totalorder %s67, %s68
      %p79 = scmp.eq.s32.totalorder %s17, 0
      %p80 = por %p78, %p79
      %p81 = scmp.ne.s32.totalorder %s67, %s68
      %p82 = scmp.eq.s32.totalorder %s18, 2
      %p83 = por %p81, %p82
      %p85 = scmp.ne.s32.totalorder %s68, %s84
      %p86 = scmp.eq.s32.totalorder %s18, 0
      %p87 = por %p85, %p86
      %s88 = ssub.s32 %s12, %s19
      %p89 = scmp.eq.s32.totalorder %s88, 0
      %s91 = sadd.s32 %s90, 1
      %s92 = scalar_select %p89, %s90, %s91
      %p95 = pneg %p89
      %p96 = scmp.eq.s32.totalorder %s12, 2
      %p97 = por %p95, %p96
      %p98 = scmp.ne.s32.totalorder %s90, %s93
      %p99 = scmp.eq.s32.totalorder %s12, 0
      %p100 = por %p98, %p99
      %p101 = scmp.ne.s32.totalorder %s90, %s93
      %p102 = scmp.eq.s32.totalorder %s17, 2
      %p103 = por %p101, %p102
      %p104 = scmp.ne.s32.totalorder %s93, %s94
      %p105 = scmp.eq.s32.totalorder %s17, 0
      %p106 = por %p104, %p105
      %p107 = scmp.ne.s32.totalorder %s93, %s94
      %p108 = scmp.eq.s32.totalorder %s18, 2
      %p109 = por %p107, %p108
      %p111 = scmp.ne.s32.totalorder %s94, %s110
      %p112 = scmp.eq.s32.totalorder %s18, 0
      %p113 = por %p111, %p112
      %p114 = scmp.le.s32.totalorder 1, %s12
      %p115 = scmp.lt.s32.totalorder %s12, 4
      %p116 = pnand %p114, %p115
      %p117 = pneg %p116
      // Predicated region
      $region9: #{shopee_forward.3} parent=5 // pred_check
        _
      $region10: #{shopee_forward.3} parent=5 // pred_check_branch
        %119 = sbr.rel (%p116) target = $region12
      $region11: #{shopee_forward.3} parent=5 // pred_region
        %s120 = ssub.s32 %s12, 1
        // Predicated region
        $region13: #{shopee_forward.3} parent=11 // pred_check
          %p121 = pneg %p33
        $region14: #{shopee_forward.3} parent=11 // pred_check_branch
          %123 = sbr.rel (%p121) target = $region16
        $region15: #{shopee_forward.3} parent=11 // pred_region
          _
        $region16: #{shopee_forward.3} parent=11 // pred_fallthru
          _
        // Predicated region
        $region17: #{shopee_forward.3} parent=11 // pred_check
          %p124 = pneg %p54
        $region18: #{shopee_forward.3} parent=11 // pred_check_branch
          %126 = sbr.rel (%p124) target = $region20
        $region19: #{shopee_forward.3} parent=11 // pred_region
          _
        $region20: #{shopee_forward.3} parent=11 // pred_fallthru
          _
      $region12: #{shopee_forward.3} parent=5 // pred_fallthru
        _
      %p127 = scmp.lt.s32.totalorder %s12, 3
      // Predicated region
      $region21: #{shopee_forward.3} parent=5 // pred_check
        %p128 = pneg %p127
      $region22: #{shopee_forward.3} parent=5 // pred_check_branch
        %130 = sbr.rel (%p128) target = $region24
      $region23: #{shopee_forward.3} parent=5 // pred_region
        // Predicated region
        $region25: #{shopee_forward.3} parent=23 // pred_check
          %p131 = pneg %p74
        $region26: #{shopee_forward.3} parent=23 // pred_check_branch
          %133 = sbr.rel (%p131) target = $region28
        $region27: #{shopee_forward.3} parent=23 // pred_region
          %s134 = sand.u32 %s64, 1
          %s135 = sand.u32 %s64, 1
          %s136 = smul.addr %s135, 64
          %s137 = scalar_lea.vmem [#allocation2], %s136
          %s138 = smul.addr %s12, 4
          %s139 = scalar_lea.vmem %s2, %s138
          // Predicated region
          $region29: #{shopee_forward.3} parent=27 // pred_check
            _
          $region30: #{shopee_forward.3} parent=27 // pred_check_branch
            %141 = sbr.rel (0) target = $region32
          $region31: #{shopee_forward.3} parent=27 // pred_region
            // Predicated region
            $region33: #{shopee_forward.3} parent=31 // pred_check
              _
            $region34: #{shopee_forward.3} parent=31 // pred_check_branch
              %143 = sbr.rel target = $region36
            $region35: #{shopee_forward.3} parent=31 // pred_region
              // Predicated region
              $region48: #{shopee_forward.3} parent=35 // pred_check
                _
              $region49: #{shopee_forward.3} parent=35 // pred_check_branch
                %188 = sbr.rel (0) target = $region51
              $region50: #{shopee_forward.3} parent=35 // pred_region
                loop: start=0, step=1, limit=1
                $region52: #{shopee_forward.3} parent=50 // loop_pre_header
                  _
                $region53: #{shopee_forward.3} parent=50 // loop_header
                  %s190 = sphi 0, %s194
                  %p191 = scmp.ge.s32.totalorder %s190, 1
                  %s195 = sphi %s139, %s139
                  %s196 = sphi %s137, %s137
                $region54: #{shopee_forward.3} parent=50 // loop_header_branch
                  %193 = sbr.rel (%p191) target = $region58
                $region55: #{shopee_forward.3} parent=50 // loop_body
                  _
                $region56: #{shopee_forward.3} parent=50 // loop_footer
                  %s194 = sadd.s32 1, %s190
                $region57: #{shopee_forward.3} parent=50 // loop_footer_branch
                  %189 = sbr.rel target = $region53
                $region58: #{shopee_forward.3} parent=50 // loop_exit
                  _
                loop: start=0, step=1, limit=1
                $region59: #{shopee_forward.3} parent=50 // loop_pre_header
                  _
                $region60: #{shopee_forward.3} parent=50 // loop_header
                  %s199 = sphi 0, %s203
                  %p200 = scmp.ge.s32.totalorder %s199, 1
                  %s204 = sphi %s139, %s139
                  %s205 = sphi %s137, %s137
                $region61: #{shopee_forward.3} parent=50 // loop_header_branch
                  %202 = sbr.rel (%p200) target = $region65
                $region62: #{shopee_forward.3} parent=50 // loop_body
                  %v206 = vld [vmem:[%s204] sm:$0xf]
                  %207 = vst [vmem:[%s205] sm:$0xf] %v206
                  %v208 = vld [vmem:[%s204 + $0xc] sm:$0xf]
                  %209 = vst [vmem:[%s205 + $0x4] sm:$0xf] %v208
                  %v210 = vld [vmem:[%s204 + $0x18] sm:$0xf]
                  %211 = vst [vmem:[%s205 + $0x8] sm:$0xf] %v210
                  %v212 = vld [vmem:[%s204 + $0x24] sm:$0xf]
                  %213 = vst [vmem:[%s205 + $0xc] sm:$0xf] %v212
                  %v214 = vld [vmem:[%s204 + $0x30] sm:$0xf]
                  %215 = vst [vmem:[%s205 + $0x10] sm:$0xf] %v214
                  %v216 = vld [vmem:[%s204 + $0x3c] sm:$0xf]
                  %217 = vst [vmem:[%s205 + $0x14] sm:$0xf] %v216
                  %v218 = vld [vmem:[%s204 + $0x48] sm:$0xf]
                  %219 = vst [vmem:[%s205 + $0x18] sm:$0xf] %v218
                  %v220 = vld [vmem:[%s204 + $0x54] sm:$0xf]
                  %221 = vst [vmem:[%s205 + $0x1c] sm:$0xf] %v220
                  %v222 = vld [vmem:[%s204 + $0x60] sm:$0xf]
                  %223 = vst [vmem:[%s205 + $0x20] sm:$0xf] %v222
                  %v224 = vld [vmem:[%s204 + $0x6c] sm:$0xf]
                  %225 = vst [vmem:[%s205 + $0x24] sm:$0xf] %v224
                  %v226 = vld [vmem:[%s204 + $0x78] sm:$0xf]
                  %227 = vst [vmem:[%s205 + $0x28] sm:$0xf] %v226
                  %v228 = vld [vmem:[%s204 + $0x84] sm:$0xf]
                  %229 = vst [vmem:[%s205 + $0x2c] sm:$0xf] %v228
                  %v230 = vld [vmem:[%s204 + $0x90] sm:$0xf]
                  %231 = vst [vmem:[%s205 + $0x30] sm:$0xf] %v230
                  %v232 = vld [vmem:[%s204 + $0x9c] sm:$0xf]
                  %233 = vst [vmem:[%s205 + $0x34] sm:$0xf] %v232
                  %v234 = vld [vmem:[%s204 + $0xa8] sm:$0xf]
                  %235 = vst [vmem:[%s205 + $0x38] sm:$0xf] %v234
                  %v236 = vld [vmem:[%s204 + $0xb4] sm:$0xf]
                  %237 = vst [vmem:[%s205 + $0x3c] sm:$0xf] %v236
                $region63: #{shopee_forward.3} parent=50 // loop_footer
                  %s203 = sadd.s32 1, %s199
                $region64: #{shopee_forward.3} parent=50 // loop_footer_branch
                  %198 = sbr.rel target = $region60
                $region65: #{shopee_forward.3} parent=50 // loop_exit
                  _
              $region51: #{shopee_forward.3} parent=35 // pred_fallthru
                _
            $region36: #{shopee_forward.3} parent=31 // pred_fallthru
              _
            // Predicated region
            $region37: #{shopee_forward.3} parent=31 // pred_check
              _
            $region38: #{shopee_forward.3} parent=31 // pred_check_branch
              %145 = sbr.rel (0) target = $region40
            $region39: #{shopee_forward.3} parent=31 // pred_region
              loop: start=0, step=1, limit=1
              $region41: #{shopee_forward.3} parent=39 // loop_pre_header
                _
              $region42: #{shopee_forward.3} parent=39 // loop_header
                %s148 = sphi 0, %s152
                %p149 = scmp.ge.s32.totalorder %s148, 1
                %s153 = sphi %s139, %s139
                %s154 = sphi %s137, %s137
              $region43: #{shopee_forward.3} parent=39 // loop_header_branch
                %151 = sbr.rel (%p149) target = $region47
              $region44: #{shopee_forward.3} parent=39 // loop_body
                %v155 = vld [vmem:[%s153] sm:$0xf]
                %156 = vst [vmem:[%s154] sm:$0xf] %v155
                %v157 = vld [vmem:[%s153 + $0xc] sm:$0xf]
                %158 = vst [vmem:[%s154 + $0x4] sm:$0xf] %v157
                %v159 = vld [vmem:[%s153 + $0x18] sm:$0xf]
                %160 = vst [vmem:[%s154 + $0x8] sm:$0xf] %v159
                %v161 = vld [vmem:[%s153 + $0x24] sm:$0xf]
                %162 = vst [vmem:[%s154 + $0xc] sm:$0xf] %v161
                %v163 = vld [vmem:[%s153 + $0x30] sm:$0xf]
                %164 = vst [vmem:[%s154 + $0x10] sm:$0xf] %v163
                %v165 = vld [vmem:[%s153 + $0x3c] sm:$0xf]
                %166 = vst [vmem:[%s154 + $0x14] sm:$0xf] %v165
                %v167 = vld [vmem:[%s153 + $0x48] sm:$0xf]
                %168 = vst [vmem:[%s154 + $0x18] sm:$0xf] %v167
                %v169 = vld [vmem:[%s153 + $0x54] sm:$0xf]
                %170 = vst [vmem:[%s154 + $0x1c] sm:$0xf] %v169
                %v171 = vld [vmem:[%s153 + $0x60] sm:$0xf]
                %172 = vst [vmem:[%s154 + $0x20] sm:$0xf] %v171
                %v173 = vld [vmem:[%s153 + $0x6c] sm:$0xf]
                %174 = vst [vmem:[%s154 + $0x24] sm:$0xf] %v173
                %v175 = vld [vmem:[%s153 + $0x78] sm:$0xf]
                %176 = vst [vmem:[%s154 + $0x28] sm:$0xf] %v175
                %v177 = vld [vmem:[%s153 + $0x84] sm:$0xf]
                %178 = vst [vmem:[%s154 + $0x2c] sm:$0xf] %v177
                %v179 = vld [vmem:[%s153 + $0x90] sm:$0xf]
                %180 = vst [vmem:[%s154 + $0x30] sm:$0xf] %v179
                %v181 = vld [vmem:[%s153 + $0x9c] sm:$0xf]
                %182 = vst [vmem:[%s154 + $0x34] sm:$0xf] %v181
                %v183 = vld [vmem:[%s153 + $0xa8] sm:$0xf]
                %184 = vst [vmem:[%s154 + $0x38] sm:$0xf] %v183
                %v185 = vld [vmem:[%s153 + $0xb4] sm:$0xf]
                %186 = vst [vmem:[%s154 + $0x3c] sm:$0xf] %v185
              $region45: #{shopee_forward.3} parent=39 // loop_footer
                %s152 = sadd.s32 1, %s148
              $region46: #{shopee_forward.3} parent=39 // loop_footer_branch
                %147 = sbr.rel target = $region42
              $region47: #{shopee_forward.3} parent=39 // loop_exit
                _
            $region40: #{shopee_forward.3} parent=31 // pred_fallthru
              _
          $region32: #{shopee_forward.3} parent=27 // pred_fallthru
            _
          %238 = vnop
        $region28: #{shopee_forward.3} parent=23 // pred_fallthru
          _
      $region24: #{shopee_forward.3} parent=5 // pred_fallthru
        _
      %p239 = scmp.le.s32.totalorder 1, %s12
      %p240 = scmp.lt.s32.totalorder %s12, 4
      %p241 = pnand %p239, %p240
      %p242 = pneg %p241
      // Predicated region
      $region66: #{shopee_forward.3} parent=5 // pred_check
        _
      $region67: #{shopee_forward.3} parent=5 // pred_check_branch
        %244 = sbr.rel (%p241) target = $region69
      $region68: #{shopee_forward.3} parent=5 // pred_region
        %s245 = ssub.s32 %s12, 1
        %s246 = sand.u32 %s67, 1
        %s247 = sand.u32 %s67, 1
        %s248 = smul.addr %s247, 64
        %s249 = scalar_lea.vmem [#allocation2], %s248
        // Predicated region
        $region70: #{shopee_forward.3} parent=68 // pred_check
          %p250 = pneg %p80
        $region71: #{shopee_forward.3} parent=68 // pred_check_branch
          %252 = sbr.rel (%p250) target = $region73
        $region72: #{shopee_forward.3} parent=68 // pred_region
          _
        $region73: #{shopee_forward.3} parent=68 // pred_fallthru
          _
        %p253 = pneg %p33
        %p254 = pneg %p30
        %p255 = pneg %p54
        %p256 = pneg %p51
        %s257 = sand.u32 %s67, 1
        %s258 = sand.u32 %s67, 1
        %s259 = smul.addr %s258, 64
        %s260 = scalar_lea.vmem [#allocation2], %s259
        %p261 = pneg %p80
        %p262 = pneg %p77
        %p263 = pneg %p106
        %p264 = pneg %p103
        %s265 = sand.u32 %s93, 1
        %s266 = scalar_lea.sflag [#allocation4], %s265
        %s267 = sand.u32 %s93, 1
        %s268 = smul.addr %s267, 4
        %s269 = scalar_lea.vmem [#allocation3], %s268
        %v271 = vld [vmem:[%s249] sm:$0xf]
        %v272 = vld [vmem:[%s249 + $0x4] sm:$0xf]
        %v273 = vld [vmem:[%s249 + $0x8] sm:$0xf]
        %v274 = vld [vmem:[%s249 + $0xc] sm:$0xf]
        %v275 = vld [vmem:[%s249 + $0x10] sm:$0xf]
        %v276 = vld [vmem:[%s249 + $0x14] sm:$0xf]
        %v277 = vld [vmem:[%s249 + $0x18] sm:$0xf]
        %v278 = vld [vmem:[%s249 + $0x1c] sm:$0xf]
        %v279 = vld [vmem:[%s249 + $0x20] sm:$0xf]
        %v280 = vld [vmem:[%s249 + $0x24] sm:$0xf]
        %v281 = vld [vmem:[%s249 + $0x28] sm:$0xf]
        %v282 = vld [vmem:[%s249 + $0x2c] sm:$0xf]
        %v283 = vld [vmem:[%s249 + $0x30] sm:$0xf]
        %v284 = vld [vmem:[%s249 + $0x34] sm:$0xf]
        %v285 = vld [vmem:[%s249 + $0x38] sm:$0xf]
        %v286 = vld [vmem:[%s249 + $0x3c] sm:$0xf]
        %v287 = vunpack.c.l.bf16 %v271
        %v288 = vunpack.c.l.bf16 %v272
        %v289 = vunpack.c.l.bf16 %v273
        %v290 = vunpack.c.l.bf16 %v274
        %v291 = vunpack.c.l.bf16 %v275
        %v292 = vunpack.c.l.bf16 %v276
        %v293 = vunpack.c.l.bf16 %v277
        %v294 = vunpack.c.l.bf16 %v278
        %v295 = vunpack.c.l.bf16 %v279
        %v296 = vunpack.c.l.bf16 %v280
        %v297 = vunpack.c.l.bf16 %v281
        %v298 = vunpack.c.l.bf16 %v282
        %v299 = vunpack.c.l.bf16 %v283
        %v300 = vunpack.c.l.bf16 %v284
        %v301 = vunpack.c.l.bf16 %v285
        %v302 = vunpack.c.l.bf16 %v286
        %v303 = vmul.f32 %v287, %v287
        %v304 = vmul.f32 %v288, %v288
        %v305 = vmul.f32 %v289, %v289
        %v306 = vmul.f32 %v290, %v290
        %v307 = vmul.f32 %v291, %v291
        %v308 = vmul.f32 %v292, %v292
        %v309 = vmul.f32 %v293, %v293
        %v310 = vmul.f32 %v294, %v294
        %v311 = vmul.f32 %v295, %v295
        %v312 = vmul.f32 %v296, %v296
        %v313 = vmul.f32 %v297, %v297
        %v314 = vmul.f32 %v298, %v298
        %v315 = vmul.f32 %v299, %v299
        %v316 = vmul.f32 %v300, %v300
        %v317 = vmul.f32 %v301, %v301
        %v318 = vmul.f32 %v302, %v302
        %v319 = vadd.f32 %v303, %v304
        %v320 = vadd.f32 %v319, %v305
        %v321 = vadd.f32 %v320, %v306
        %v322 = vadd.f32 %v321, %v307
        %v323 = vadd.f32 %v322, %v308
        %v324 = vadd.f32 %v323, %v309
        %v325 = vadd.f32 %v324, %v310
        %v326 = vadd.f32 %v325, %v311
        %v327 = vadd.f32 %v326, %v312
        %v328 = vadd.f32 %v327, %v313
        %v329 = vadd.f32 %v328, %v314
        %v330 = vadd.f32 %v329, %v315
        %v331 = vadd.f32 %v330, %v316
        %v332 = vadd.f32 %v331, %v317
        %v333 = vadd.f32 %v332, %v318
        %v334 = vrot.slane %v333, 4
        %v335 = vadd.f32 %v333, %v334
        %v336 = vrot.slane %v335, 2
        %v337 = vadd.f32 %v335, %v336
        %v338 = vrot.slane %v337, 1
        %v339 = vadd.f32 %v337, %v338
        %v340 = vmax.f32 %v339, 1e-24
        %v341 = vrsqrt.pop %v340
        %v342 = vld [vmem:[%s0] sm:$0xf]
        %v343 = vpack.c.bf16 %v342, %v342
        %v360 = vunpack.c.l.b16 %v271
        %v361 = vunpack.c.l.b16 %v272
        %v362 = vunpack.c.l.b16 %v273
        %v363 = vunpack.c.l.b16 %v274
        %v364 = vunpack.c.l.b16 %v275
        %v365 = vunpack.c.l.b16 %v276
        %v366 = vunpack.c.l.b16 %v277
        %v367 = vunpack.c.l.b16 %v278
        %v368 = vunpack.c.l.b16 %v279
        %v369 = vunpack.c.l.b16 %v280
        %v370 = vunpack.c.l.b16 %v281
        %v371 = vunpack.c.l.b16 %v282
        %v372 = vunpack.c.l.b16 %v283
        %v373 = vunpack.c.l.b16 %v284
        %v374 = vunpack.c.l.b16 %v285
        %v375 = vunpack.c.l.b16 %v286
        %v376 = vpack.c.b16 %v361, %v360
        %v377 = vpack.c.b16 %v363, %v362
        %v378 = vpack.c.b16 %v365, %v364
        %v379 = vpack.c.b16 %v367, %v366
        %v380 = vpack.c.b16 %v369, %v368
        %v381 = vpack.c.b16 %v371, %v370
        %v382 = vpack.c.b16 %v373, %v372
        %v383 = vpack.c.b16 %v375, %v374
        %392 = vmatprep.subr.bf16.mxu0 0
        %393 = vmatpush1.bf16.msra.mxu0 %v376
        %394 = vmatprep.subr.bf16.mxu0 0
        %395 = vmatpush1.bf16.msra.mxu0 %v377
        %396 = vmatprep.subr.bf16.mxu0 0
        %397 = vmatpush1.bf16.msra.mxu0 %v378
        %398 = vmatprep.subr.bf16.mxu0 0
        %399 = vmatpush1.bf16.msra.mxu0 %v379
        %400 = vmatprep.subr.bf16.mxu0 0
        %401 = vmatpush1.bf16.msra.mxu0 %v380
        %402 = vmatprep.subr.bf16.mxu0 0
        %403 = vmatpush1.bf16.msra.mxu0 %v381
        %404 = vmatprep.subr.bf16.mxu0 0
        %405 = vmatpush1.bf16.msra.mxu0 %v382
        %406 = vmatprep.subr.bf16.mxu0 0
        %407 = vmatpush1.bf16.msra.mxu0 %v383
        %408 = vmatprep.subr.bf16.mxu0 0
        %409 = vmatpush1.bf16.msra.mxu0 0
        %410 = vmatprep.subr.bf16.mxu0 0
        %411 = vmatpush1.bf16.msra.mxu0 0
        %412 = vmatprep.subr.bf16.mxu0 0
        %413 = vmatpush1.bf16.msra.mxu0 0
        %414 = vmatprep.subr.bf16.mxu0 0
        %415 = vmatpush1.bf16.msra.mxu0 0
        %416 = vmatprep.subr.bf16.mxu0 0
        %417 = vmatpush1.bf16.msra.mxu0 0
        %418 = vmatprep.subr.bf16.mxu0 0
        %419 = vmatpush1.bf16.msra.mxu0 0
        %420 = vmatprep.subr.bf16.mxu0 0
        %421 = vmatpush1.bf16.msra.mxu0 0
        %422 = vmatprep.subr.bf16.mxu0 0
        %423 = vmatpush1.bf16.msra.mxu0 0
        %424 = vmatprep.mubr.bf16.mxu0 0
        %425 = vmatmul.mubr.bf16.gmra.mrb[0].mxu0 %v343
        %v426 = vpop.f32.mrb[0].mxu0
        %v427 = vadd.f32 0.0, %v426
        %v428 = vpop.f32.mrb[0].mxu0
        %v429 = vpop.f32.mrb[0].mxu0
        %v430 = vpop.f32.mrb[0].mxu0
        %431 = vdwg.mxu0
        %v432 = vmul.f32 %v427, %v341
        %v433 = vlaneseq
        %v434 = vand.u32 %v433, 127
        %s435 = smul.u32 %s17, 128
        %v436 = vstv %s435
        %v437 = vadd.s32 %v434, %v436
        %v438 = vld [vmem:[%s1] sm:$0xf]
        %439 = vset.pattern.permute.xlu0 0
        %440 = vperm.xlu0 %439, %v438
        %v441 = vpop.permute.xlu0 %440
        %vm442 = vcmp.eq.s32.totalorder %v437, %v441
        %v443 = vsel %vm442, 1, 0
        %v444 = vcvt.s32.f32 %v443
        %v445 = vmul.f32 %v432, %v444
        %vm446 = vcmask 1043456
        %v447 = vsel %vm446, %v445, 0.0
        %448 = vadd.xlane.f32.xlu0 %v447
        %v449 = vpop.xlane.xlu0 %448
        %v450 = vmul.f32 %v449, %v449
        %v451 = vsub.f32 1.0, %v450
        %v452 = vmax.f32 %v451, 0.0
        %v453 = vrsqrt.pop %v452
        %v454 = vmul.f32 %v452, %v453
        %vm455 = vcmp.eq.f32.partialorder %v452, inf
        %v456 = vsel %vm455, %v452, %v454
        %vm457 = vcmp.eq.f32.partialorder %v452, 0.0
        %v458 = vand.u32 %v452, 2147483648
        %v459 = vsel %vm457, %v458, %v456
        %v460 = vmul.f32 %v449, 0.87758255
        %v461 = vmul.f32 %v459, 0.47942555
        %v462 = vsub.f32 %v460, %v461
        %vm463 = vcmp.gt.f32.partialorder %v449, -0.87758255
        %v464 = vsub.f32 %v449, 0.23971277
        %v465 = vsel %vm463, %v462, %v464
        %v466 = vsub.f32 %v465, %v449
        %v467 = vmul.f32 %v444, %v466
        %v468 = vadd.f32 %v432, %v467
        %v469 = vmul.f32 %v468, 30.0
        %470 = vst [vmem:[%s269] sm:$0xf] %v469
        %s471 = sand.u32 %s93, 1
        %s472 = scalar_lea.sflag [#allocation4], %s471
        %s473 = sand.u32 %s93, 1
        %s474 = smul.addr %s473, 4
        %s475 = scalar_lea.vmem [#allocation3], %s474
        // Predicated region
        $region74: #{shopee_forward.3} parent=68 // pred_check
          %p476 = pneg %p103
        $region75: #{shopee_forward.3} parent=68 // pred_check_branch
          %478 = sbr.rel (%p476) target = $region77
        $region76: #{shopee_forward.3} parent=68 // pred_region
          %s480 = ssub.s32 64, 64
          %481 = vsyncadd %s472, %s480
          %s482 = smul.addr %s17, 64
          %s483 = scalar_lea.hbm %s3, %s482
          %s485 = sshll.u32 %s475, 4
          %s486 = int_to_ptr.vmem [resolvable:$true] %s485
          %488 = dma.vmem_to_hbm [thread:$0]  %s486, 64, %s483, %s472
        $region77: #{shopee_forward.3} parent=68 // pred_fallthru
          _
      $region69: #{shopee_forward.3} parent=5 // pred_fallthru
        _
      %p489 = scmp.le.s32.totalorder 2, %s12
      // Predicated region
      $region78: #{shopee_forward.3} parent=5 // pred_check
        %p490 = pneg %p489
      $region79: #{shopee_forward.3} parent=5 // pred_check_branch
        %492 = sbr.rel (%p490) target = $region81
      $region80: #{shopee_forward.3} parent=5 // pred_region
        %s493 = ssub.s32 %s12, 2
        // Predicated region
        $region82: #{shopee_forward.3} parent=80 // pred_check
          %p494 = pneg %p109
        $region83: #{shopee_forward.3} parent=80 // pred_check_branch
          %496 = sbr.rel (%p494) target = $region85
        $region84: #{shopee_forward.3} parent=80 // pred_region
          %s497 = sand.u32 %s94, 1
          %s498 = scalar_lea.sflag [#allocation4], %s497
          %s499 = sand.u32 %s94, 1
          %s500 = smul.addr %s499, 4
          %s501 = scalar_lea.vmem [#allocation3], %s500
          %502 = dma.done %s498, 64
        $region85: #{shopee_forward.3} parent=80 // pred_fallthru
          _
      $region81: #{shopee_forward.3} parent=5 // pred_fallthru
        _
    $region6: #{shopee_forward.3} parent=1 // loop_footer
      %s16 = sadd.s32 1, %s12
    $region7: #{shopee_forward.3} parent=1 // loop_footer_branch
      %11 = sbr.rel target = $region3
    $region8: #{shopee_forward.3} parent=1 // loop_exit
      _
    %503 = vsyncpa [#allocation4], 1
    %s504 = scalar_lea.sflag [#allocation4], 1
    %505 = vsyncpa %s504, 1

// kernel: shopee_forward.2
$region0: #{shopee_forward.2}
  #allocation0 [shape = 'u32[]', space=smem, size = 0x4, offset = 0x4, fixed_abs, tag = 'smem constant byte address 0x4 - core index']
  #allocation1 [shape = 'u32[144,128]{1,0:T(1,128)}', space=vmem, size = 0x12000, scoped, tag = 'internal scratch']
  #allocation2 [shape = 'f32[4,32]{1,0:T(4,128)}', space=vmem, size = 0x800, scoped, tag = 'scratch operand']
  %s0 = inlined_call_operand.vmem [shape: f32[4,3,1024], index: 0, kind: input, shape index: {}]
  %s1 = inlined_call_operand.vmem [shape: f32[4,32], index: 1, kind: input, shape index: {}]
  %s2 = inlined_call_operand.vmem [shape: f32[3,32,1], index: 2, kind: input, shape index: {}]
  %s3 = inlined_call_operand.vmem [shape: f32[1,32,1], index: 3, kind: input, shape index: {}]
  %s4 = inlined_call_operand.vmem [shape: f32[32,32], index: 4, kind: input, shape index: {}]
  %s5 = inlined_call_operand.vmem [shape: f32[1,32], index: 5, kind: input, shape index: {}]
  %s6 = inlined_call_operand.vmem [shape: f32[64,32], index: 6, kind: input, shape index: {}]
  %s7 = inlined_call_operand.vmem [shape: f32[1,32], index: 7, kind: input, shape index: {}]
  %s8 = inlined_call_operand.vmem [shape: f32[1,32], index: 8, kind: input, shape index: {}]
  %s9 = inlined_call_operand.vmem [shape: f32[1,32], index: 9, kind: input, shape index: {}]
  %s10 = inlined_call_operand.vmem [shape: f32[4,128], index: 10, kind: output, shape index: {}]
  %s11 = sld [smem:[#allocation0]]
  $region104: #{shopee_forward.2} parent=0
    _
  %s13 = ssub.s32 1, %s11
  %s14 = scalar_select 0, %s13, %s11
  $region1: #{shopee_forward.2} parent=0
    #allocation3 [shape = 'u8[65536]{0}', space=vmem, size = 0x10000, scoped, tag = 'input window, operand 0']
    loop: start=0, step=1, limit=4
    $region2: #{shopee_forward.2} parent=1 // loop_pre_header
      _
    $region3: #{shopee_forward.2} parent=1 // loop_header
      %s16 = sphi 0, %s20
      %p17 = scmp.ge.s32.totalorder %s16, 4
      %s26 = sphi 0, %s28
      %s29 = sphi 0, %s26
      %s30 = sphi 0, %s29
      %s46 = sphi 0, %s30
      %s50 = sphi 0, %s50
      %s52 = sphi 0, %s50
      %s53 = sphi 0, %s52
      %s67 = sphi 0, %s53
      %s71 = sphi 0, %s71
      %s73 = sphi 0, %s71
      %s74 = sphi 0, %s73
      %s88 = sphi 0, %s74
      %s92 = sphi 0, %s92
      %s94 = sphi 0, %s92
      %s95 = sphi 0, %s94
      %s109 = sphi 0, %s95
      %s113 = sphi 0, %s113
      %s115 = sphi 0, %s113
      %s116 = sphi 0, %s115
      %s130 = sphi 0, %s116
      %s134 = sphi 0, %s134
      %s136 = sphi 0, %s134
      %s137 = sphi 0, %s136
      %s151 = sphi 0, %s137
      %s155 = sphi 0, %s155
      %s157 = sphi 0, %s155
      %s158 = sphi 0, %s157
      %s172 = sphi 0, %s158
      %s176 = sphi 0, %s176
      %s178 = sphi 0, %s176
      %s179 = sphi 0, %s178
      %s193 = sphi 0, %s179
      %s197 = sphi 0, %s197
      %s199 = sphi 0, %s197
      %s200 = sphi 0, %s199
      %s214 = sphi 0, %s200
      %s218 = sphi 0, %s218
      %s220 = sphi 0, %s218
      %s221 = sphi 0, %s220
      %s235 = sphi 0, %s221
      %s239 = sphi 0, %s239
      %s241 = sphi 0, %s239
      %s242 = sphi 0, %s241
      %s256 = sphi 0, %s242
    $region4: #{shopee_forward.2} parent=1 // loop_header_branch
      %19 = sbr.rel (%p17) target = $region8
    $region5: #{shopee_forward.2} parent=1 // loop_body
      %s21 = ssub.s32 %s16, 1
      %s22 = ssub.s32 %s16, 2
      %s23 = sadd.s32 %s16, 1
      %s24 = ssub.s32 %s16, %s23
      %p25 = scmp.eq.s32.totalorder %s24, 0
      %s27 = sadd.s32 %s26, 1
      %s28 = scalar_select %p25, %s26, %s27
      %p31 = pneg %p25
      %p32 = scmp.eq.s32.totalorder %s16, 1
      %p33 = por %p31, %p32
      %p34 = scmp.ne.s32.totalorder %s26, %s29
      %p35 = scmp.eq.s32.totalorder %s16, 0
      %p36 = por %p34, %p35
      %p37 = scmp.ne.s32.totalorder %s26, %s29
      %p38 = scmp.eq.s32.totalorder %s21, 1
      %p39 = por %p37, %p38
      %p40 = scmp.ne.s32.totalorder %s29, %s30
      %p41 = scmp.eq.s32.totalorder %s21, 0
      %p42 = por %p40, %p41
      %p43 = scmp.ne.s32.totalorder %s29, %s30
      %p44 = scmp.eq.s32.totalorder %s22, 1
      %p45 = por %p43, %p44
      %p47 = scmp.ne.s32.totalorder %s30, %s46
      %p48 = scmp.eq.s32.totalorder %s22, 0
      %p49 = por %p47, %p48
      %s51 = sadd.s32 %s50, 1
      %p54 = scmp.eq.s32.totalorder %s16, 1
      %p55 = scmp.ne.s32.totalorder %s50, %s52
      %p56 = scmp.eq.s32.totalorder %s16, 0
      %p57 = por %p55, %p56
      %p58 = scmp.ne.s32.totalorder %s50, %s52
      %p59 = scmp.eq.s32.totalorder %s21, 1
      %p60 = por %p58, %p59
      %p61 = scmp.ne.s32.totalorder %s52, %s53
      %p62 = scmp.eq.s32.totalorder %s21, 0
      %p63 = por %p61, %p62
      %p64 = scmp.ne.s32.totalorder %s52, %s53
      %p65 = scmp.eq.s32.totalorder %s22, 1
      %p66 = por %p64, %p65
      %p68 = scmp.ne.s32.totalorder %s53, %s67
      %p69 = scmp.eq.s32.totalorder %s22, 0
      %p70 = por %p68, %p69
      %s72 = sadd.s32 %s71, 1
      %p75 = scmp.eq.s32.totalorder %s16, 1
      %p76 = scmp.ne.s32.totalorder %s71, %s73
      %p77 = scmp.eq.s32.totalorder %s16, 0
      %p78 = por %p76, %p77
      %p79 = scmp.ne.s32.totalorder %s71, %s73
      %p80 = scmp.eq.s32.totalorder %s21, 1
      %p81 = por %p79, %p80
      %p82 = scmp.ne.s32.totalorder %s73, %s74
      %p83 = scmp.eq.s32.totalorder %s21, 0
      %p84 = por %p82, %p83
      %p85 = scmp.ne.s32.totalorder %s73, %s74
      %p86 = scmp.eq.s32.totalorder %s22, 1
      %p87 = por %p85, %p86
      %p89 = scmp.ne.s32.totalorder %s74, %s88
      %p90 = scmp.eq.s32.totalorder %s22, 0
      %p91 = por %p89, %p90
      %s93 = sadd.s32 %s92, 1
      %p96 = scmp.eq.s32.totalorder %s16, 1
      %p97 = scmp.ne.s32.totalorder %s92, %s94
      %p98 = scmp.eq.s32.totalorder %s16, 0
      %p99 = por %p97, %p98
      %p100 = scmp.ne.s32.totalorder %s92, %s94
      %p101 = scmp.eq.s32.totalorder %s21, 1
      %p102 = por %p100, %p101
      %p103 = scmp.ne.s32.totalorder %s94, %s95
      %p104 = scmp.eq.s32.totalorder %s21, 0
      %p105 = por %p103, %p104
      %p106 = scmp.ne.s32.totalorder %s94, %s95
      %p107 = scmp.eq.s32.totalorder %s22, 1
      %p108 = por %p106, %p107
      %p110 = scmp.ne.s32.totalorder %s95, %s109
      %p111 = scmp.eq.s32.totalorder %s22, 0
      %p112 = por %p110, %p111
      %s114 = sadd.s32 %s113, 1
      %p117 = scmp.eq.s32.totalorder %s16, 1
      %p118 = scmp.ne.s32.totalorder %s113, %s115
      %p119 = scmp.eq.s32.totalorder %s16, 0
      %p120 = por %p118, %p119
      %p121 = scmp.ne.s32.totalorder %s113, %s115
      %p122 = scmp.eq.s32.totalorder %s21, 1
      %p123 = por %p121, %p122
      %p124 = scmp.ne.s32.totalorder %s115, %s116
      %p125 = scmp.eq.s32.totalorder %s21, 0
      %p126 = por %p124, %p125
      %p127 = scmp.ne.s32.totalorder %s115, %s116
      %p128 = scmp.eq.s32.totalorder %s22, 1
      %p129 = por %p127, %p128
      %p131 = scmp.ne.s32.totalorder %s116, %s130
      %p132 = scmp.eq.s32.totalorder %s22, 0
      %p133 = por %p131, %p132
      %s135 = sadd.s32 %s134, 1
      %p138 = scmp.eq.s32.totalorder %s16, 1
      %p139 = scmp.ne.s32.totalorder %s134, %s136
      %p140 = scmp.eq.s32.totalorder %s16, 0
      %p141 = por %p139, %p140
      %p142 = scmp.ne.s32.totalorder %s134, %s136
      %p143 = scmp.eq.s32.totalorder %s21, 1
      %p144 = por %p142, %p143
      %p145 = scmp.ne.s32.totalorder %s136, %s137
      %p146 = scmp.eq.s32.totalorder %s21, 0
      %p147 = por %p145, %p146
      %p148 = scmp.ne.s32.totalorder %s136, %s137
      %p149 = scmp.eq.s32.totalorder %s22, 1
      %p150 = por %p148, %p149
      %p152 = scmp.ne.s32.totalorder %s137, %s151
      %p153 = scmp.eq.s32.totalorder %s22, 0
      %p154 = por %p152, %p153
      %s156 = sadd.s32 %s155, 1
      %p159 = scmp.eq.s32.totalorder %s16, 1
      %p160 = scmp.ne.s32.totalorder %s155, %s157
      %p161 = scmp.eq.s32.totalorder %s16, 0
      %p162 = por %p160, %p161
      %p163 = scmp.ne.s32.totalorder %s155, %s157
      %p164 = scmp.eq.s32.totalorder %s21, 1
      %p165 = por %p163, %p164
      %p166 = scmp.ne.s32.totalorder %s157, %s158
      %p167 = scmp.eq.s32.totalorder %s21, 0
      %p168 = por %p166, %p167
      %p169 = scmp.ne.s32.totalorder %s157, %s158
      %p170 = scmp.eq.s32.totalorder %s22, 1
      %p171 = por %p169, %p170
      %p173 = scmp.ne.s32.totalorder %s158, %s172
      %p174 = scmp.eq.s32.totalorder %s22, 0
      %p175 = por %p173, %p174
      %s177 = sadd.s32 %s176, 1
      %p180 = scmp.eq.s32.totalorder %s16, 1
      %p181 = scmp.ne.s32.totalorder %s176, %s178
      %p182 = scmp.eq.s32.totalorder %s16, 0
      %p183 = por %p181, %p182
      %p184 = scmp.ne.s32.totalorder %s176, %s178
      %p185 = scmp.eq.s32.totalorder %s21, 1
      %p186 = por %p184, %p185
      %p187 = scmp.ne.s32.totalorder %s178, %s179
      %p188 = scmp.eq.s32.totalorder %s21, 0
      %p189 = por %p187, %p188
      %p190 = scmp.ne.s32.totalorder %s178, %s179
      %p191 = scmp.eq.s32.totalorder %s22, 1
      %p192 = por %p190, %p191
      %p194 = scmp.ne.s32.totalorder %s179, %s193
      %p195 = scmp.eq.s32.totalorder %s22, 0
      %p196 = por %p194, %p195
      %s198 = sadd.s32 %s197, 1
      %p201 = scmp.eq.s32.totalorder %s16, 1
      %p202 = scmp.ne.s32.totalorder %s197, %s199
      %p203 = scmp.eq.s32.totalorder %s16, 0
      %p204 = por %p202, %p203
      %p205 = scmp.ne.s32.totalorder %s197, %s199
      %p206 = scmp.eq.s32.totalorder %s21, 1
      %p207 = por %p205, %p206
      %p208 = scmp.ne.s32.totalorder %s199, %s200
      %p209 = scmp.eq.s32.totalorder %s21, 0
      %p210 = por %p208, %p209
      %p211 = scmp.ne.s32.totalorder %s199, %s200
      %p212 = scmp.eq.s32.totalorder %s22, 1
      %p213 = por %p211, %p212
      %p215 = scmp.ne.s32.totalorder %s200, %s214
      %p216 = scmp.eq.s32.totalorder %s22, 0
      %p217 = por %p215, %p216
      %s219 = sadd.s32 %s218, 1
      %p222 = scmp.eq.s32.totalorder %s16, 1
      %p223 = scmp.ne.s32.totalorder %s218, %s220
      %p224 = scmp.eq.s32.totalorder %s16, 0
      %p225 = por %p223, %p224
      %p226 = scmp.ne.s32.totalorder %s218, %s220
      %p227 = scmp.eq.s32.totalorder %s21, 1
      %p228 = por %p226, %p227
      %p229 = scmp.ne.s32.totalorder %s220, %s221
      %p230 = scmp.eq.s32.totalorder %s21, 0
      %p231 = por %p229, %p230
      %p232 = scmp.ne.s32.totalorder %s220, %s221
      %p233 = scmp.eq.s32.totalorder %s22, 1
      %p234 = por %p232, %p233
      %p236 = scmp.ne.s32.totalorder %s221, %s235
      %p237 = scmp.eq.s32.totalorder %s22, 0
      %p238 = por %p236, %p237
      %s240 = sadd.s32 %s239, 1
      %p243 = scmp.eq.s32.totalorder %s16, 1
      %p244 = scmp.ne.s32.totalorder %s239, %s241
      %p245 = scmp.eq.s32.totalorder %s16, 0
      %p246 = por %p244, %p245
      %p247 = scmp.ne.s32.totalorder %s239, %s241
      %p248 = scmp.eq.s32.totalorder %s21, 1
      %p249 = por %p247, %p248
      %p250 = scmp.ne.s32.totalorder %s241, %s242
      %p251 = scmp.eq.s32.totalorder %s21, 0
      %p252 = por %p250, %p251
      %p253 = scmp.ne.s32.totalorder %s241, %s242
      %p254 = scmp.eq.s32.totalorder %s22, 1
      %p255 = por %p253, %p254
      %p257 = scmp.ne.s32.totalorder %s242, %s256
      %p258 = scmp.eq.s32.totalorder %s22, 0
      %p259 = por %p257, %p258
      %p260 = scmp.le.s32.totalorder 1, %s16
      %p261 = scmp.lt.s32.totalorder %s16, 3
      %p262 = pnand %p260, %p261
      %p263 = pneg %p262
      // Predicated region
      $region9: #{shopee_forward.2} parent=5 // pred_check
        _
      $region10: #{shopee_forward.2} parent=5 // pred_check_branch
        %265 = sbr.rel (%p262) target = $region12
      $region11: #{shopee_forward.2} parent=5 // pred_region
        %s266 = ssub.s32 %s16, 1
        // Predicated region
        $region13: #{shopee_forward.2} parent=11 // pred_check
          %p267 = pneg %p63
        $region14: #{shopee_forward.2} parent=11 // pred_check_branch
          %269 = sbr.rel (%p267) target = $region16
        $region15: #{shopee_forward.2} parent=11 // pred_region
          _
        $region16: #{shopee_forward.2} parent=11 // pred_fallthru
          _
        // Predicated region
        $region17: #{shopee_forward.2} parent=11 // pred_check
          %p270 = pneg %p84
        $region18: #{shopee_forward.2} parent=11 // pred_check_branch
          %272 = sbr.rel (%p270) target = $region20
        $region19: #{shopee_forward.2} parent=11 // pred_region
          _
        $region20: #{shopee_forward.2} parent=11 // pred_fallthru
          _
        // Predicated region
        $region21: #{shopee_forward.2} parent=11 // pred_check
          %p273 = pneg %p105
        $region22: #{shopee_forward.2} parent=11 // pred_check_branch
          %275 = sbr.rel (%p273) target = $region24
        $region23: #{shopee_forward.2} parent=11 // pred_region
          _
        $region24: #{shopee_forward.2} parent=11 // pred_fallthru
          _
        // Predicated region
        $region25: #{shopee_forward.2} parent=11 // pred_check
          %p276 = pneg %p126
        $region26: #{shopee_forward.2} parent=11 // pred_check_branch
          %278 = sbr.rel (%p276) target = $region28
        $region27: #{shopee_forward.2} parent=11 // pred_region
          _
        $region28: #{shopee_forward.2} parent=11 // pred_fallthru
          _
        // Predicated region
        $region29: #{shopee_forward.2} parent=11 // pred_check
          %p279 = pneg %p147
        $region30: #{shopee_forward.2} parent=11 // pred_check_branch
          %281 = sbr.rel (%p279) target = $region32
        $region31: #{shopee_forward.2} parent=11 // pred_region
          _
        $region32: #{shopee_forward.2} parent=11 // pred_fallthru
          _
        // Predicated region
        $region33: #{shopee_forward.2} parent=11 // pred_check
          %p282 = pneg %p168
        $region34: #{shopee_forward.2} parent=11 // pred_check_branch
          %284 = sbr.rel (%p282) target = $region36
        $region35: #{shopee_forward.2} parent=11 // pred_region
          _
        $region36: #{shopee_forward.2} parent=11 // pred_fallthru
          _
        // Predicated region
        $region37: #{shopee_forward.2} parent=11 // pred_check
          %p285 = pneg %p189
        $region38: #{shopee_forward.2} parent=11 // pred_check_branch
          %287 = sbr.rel (%p285) target = $region40
        $region39: #{shopee_forward.2} parent=11 // pred_region
          _
        $region40: #{shopee_forward.2} parent=11 // pred_fallthru
          _
        // Predicated region
        $region41: #{shopee_forward.2} parent=11 // pred_check
          %p288 = pneg %p210
        $region42: #{shopee_forward.2} parent=11 // pred_check_branch
          %290 = sbr.rel (%p288) target = $region44
        $region43: #{shopee_forward.2} parent=11 // pred_region
          _
        $region44: #{shopee_forward.2} parent=11 // pred_fallthru
          _
        // Predicated region
        $region45: #{shopee_forward.2} parent=11 // pred_check
          %p291 = pneg %p231
        $region46: #{shopee_forward.2} parent=11 // pred_check_branch
          %293 = sbr.rel (%p291) target = $region48
        $region47: #{shopee_forward.2} parent=11 // pred_region
          _
        $region48: #{shopee_forward.2} parent=11 // pred_fallthru
          _
      $region12: #{shopee_forward.2} parent=5 // pred_fallthru
        _
      %p294 = scmp.lt.s32.totalorder %s16, 2
      // Predicated region
      $region49: #{shopee_forward.2} parent=5 // pred_check
        %p295 = pneg %p294
      $region50: #{shopee_forward.2} parent=5 // pred_check_branch
        %297 = sbr.rel (%p295) target = $region52
      $region51: #{shopee_forward.2} parent=5 // pred_region
        // Predicated region
        $region53: #{shopee_forward.2} parent=51 // pred_check
          %p298 = pneg %p36
        $region54: #{shopee_forward.2} parent=51 // pred_check_branch
          %300 = sbr.rel (%p298) target = $region56
        $region55: #{shopee_forward.2} parent=51 // pred_region
          %s301 = sand.u32 %s26, 1
          %s302 = sand.u32 %s26, 1
          %s303 = smul.addr %s302, 64
          %s304 = scalar_lea.vmem [#allocation3], %s303
          %s305 = smul.u32 4, %s16
          %s306 = smul.addr %s305, 4
          %s307 = scalar_lea.vmem %s0, %s306
          // Predicated region
          $region57: #{shopee_forward.2} parent=55 // pred_check
            _
          $region58: #{shopee_forward.2} parent=55 // pred_check_branch
            %309 = sbr.rel (0) target = $region60
          $region59: #{shopee_forward.2} parent=55 // pred_region
            // Predicated region
            $region61: #{shopee_forward.2} parent=59 // pred_check
              _
            $region62: #{shopee_forward.2} parent=59 // pred_check_branch
              %311 = sbr.rel (0) target = $region64
            $region63: #{shopee_forward.2} parent=59 // pred_region
              loop: start=0, step=1, limit=1
              $region65: #{shopee_forward.2} parent=63 // loop_pre_header
                _
              $region66: #{shopee_forward.2} parent=63 // loop_header
                %s313 = sphi 0, %s317
                %p314 = scmp.ge.s32.totalorder %s313, 1
                %s318 = sphi %s307, %s307
                %s319 = sphi %s304, %s304
              $region67: #{shopee_forward.2} parent=63 // loop_header_branch
                %316 = sbr.rel (%p314) target = $region71
              $region68: #{shopee_forward.2} parent=63 // loop_body
                %v320 = vld [vmem:[%s318] sm:$0xff]
                %321 = vst [vmem:[%s319] sm:$0xff] %v320
                %v322 = vld [vmem:[%s318 + $0x8] sm:$0xff]
                %323 = vst [vmem:[%s319 + $0x8] sm:$0xff] %v322
                %v324 = vld [vmem:[%s318 + $0x20] sm:$0xff]
                %325 = vst [vmem:[%s319 + $0x10] sm:$0xff] %v324
                %v326 = vld [vmem:[%s318 + $0x28] sm:$0xff]
                %327 = vst [vmem:[%s319 + $0x18] sm:$0xff] %v326
                %v328 = vld [vmem:[%s318 + $0x40] sm:$0xff]
                %329 = vst [vmem:[%s319 + $0x20] sm:$0xff] %v328
                %v330 = vld [vmem:[%s318 + $0x48] sm:$0xff]
                %331 = vst [vmem:[%s319 + $0x28] sm:$0xff] %v330
                %v332 = vld [vmem:[%s318 + $0x60] sm:$0xff]
                %333 = vst [vmem:[%s319 + $0x30] sm:$0xff] %v332
                %v334 = vld [vmem:[%s318 + $0x68] sm:$0xff]
                %335 = vst [vmem:[%s319 + $0x38] sm:$0xff] %v334
              $region69: #{shopee_forward.2} parent=63 // loop_footer
                %s317 = sadd.s32 1, %s313
              $region70: #{shopee_forward.2} parent=63 // loop_footer_branch
                %312 = sbr.rel target = $region66
              $region71: #{shopee_forward.2} parent=63 // loop_exit
                _
            $region64: #{shopee_forward.2} parent=59 // pred_fallthru
              _
            // Predicated region
            $region72: #{shopee_forward.2} parent=59 // pred_check
              _
            $region73: #{shopee_forward.2} parent=59 // pred_check_branch
              %337 = sbr.rel target = $region75
            $region74: #{shopee_forward.2} parent=59 // pred_region
              _
            $region75: #{shopee_forward.2} parent=59 // pred_fallthru
              _
          $region60: #{shopee_forward.2} parent=55 // pred_fallthru
            _
          %338 = vnop
        $region56: #{shopee_forward.2} parent=51 // pred_fallthru
          _
      $region52: #{shopee_forward.2} parent=5 // pred_fallthru
        _
      %p339 = scmp.le.s32.totalorder 1, %s16
      %p340 = scmp.lt.s32.totalorder %s16, 3
      %p341 = pnand %p339, %p340
      %p342 = pneg %p341
      // Predicated region
      $region76: #{shopee_forward.2} parent=5 // pred_check
        _
      $region77: #{shopee_forward.2} parent=5 // pred_check_branch
        %344 = sbr.rel (%p341) target = $region79
      $region78: #{shopee_forward.2} parent=5 // pred_region
        %s345 = ssub.s32 %s16, 1
        %s346 = sand.u32 %s29, 1
        %s347 = sand.u32 %s29, 1
        %s348 = smul.addr %s347, 64
        %s349 = scalar_lea.vmem [#allocation3], %s348
        // Predicated region
        $region80: #{shopee_forward.2} parent=78 // pred_check
          %p350 = pneg %p42
        $region81: #{shopee_forward.2} parent=78 // pred_check_branch
          %352 = sbr.rel (%p350) target = $region83
        $region82: #{shopee_forward.2} parent=78 // pred_region
          _
        $region83: #{shopee_forward.2} parent=78 // pred_fallthru
          _
        %s353 = sand.u32 %s29, 1
        %s354 = sand.u32 %s29, 1
        %s355 = smul.addr %s354, 64
        %s356 = scalar_lea.vmem [#allocation3], %s355
        %p357 = pneg %p42
        %p358 = pneg %p39
        %p359 = pneg %p63
        %p360 = pneg %p60
        %p361 = pneg %p84
        %p362 = pneg %p81
        %p363 = pneg %p105
        %p364 = pneg %p102
        %p365 = pneg %p126
        %p366 = pneg %p123
        %p367 = pneg %p147
        %p368 = pneg %p144
        %p369 = pneg %p168
        %p370 = pneg %p165
        %p371 = pneg %p189
        %p372 = pneg %p186
        %p373 = pneg %p210
        %p374 = pneg %p207
        %p375 = pneg %p231
        %p376 = pneg %p228
        %p377 = pneg %p252
        %p378 = pneg %p249
        %s379 = smul.u32 4, %s21
        %p380 = scmp.eq.s32.totalorder %s21, 0
        // Predicated region
        $region84: #{shopee_forward.2} parent=78 // pred_check
          %p381 = pneg %p380
        $region85: #{shopee_forward.2} parent=78 // pred_check_branch
          %383 = sbr.rel (%p381) target = $region87
        $region86: #{shopee_forward.2} parent=78 // pred_region
          %vm384 = vcmask 257024
          %385 = vst.msk [vmem:[#allocation2] sm:$0xf] %vm384, 0.0
        $region87: #{shopee_forward.2} parent=78 // pred_fallthru
          _
        %v386 = vld [vmem:[#allocation2] sm:$0xf]
        %v387 = vld [vmem:[%s349] sm:$0x77]
        %v388 = vld [vmem:[%s349 + $0x8] sm:$0x77]
        %v389 = vld [vmem:[%s349 + $0x10] sm:$0x77]
        %v390 = vld [vmem:[%s349 + $0x18] sm:$0x77]
        %v391 = vld [vmem:[%s349 + $0x20] sm:$0x77]
        %v392 = vld [vmem:[%s349 + $0x28] sm:$0x77]
        %v393 = vld [vmem:[%s349 + $0x30] sm:$0x77]
        %v394 = vld [vmem:[%s349 + $0x38] sm:$0x77]
        %v395 = vld [vmem:[%s2] sm:$0xff]
        %v396 = vld [vmem:[%s2 + $0x8] sm:$0xff]
        %v397 = vld [vmem:[%s2 + $0x10] sm:$0xff]
        %v398 = vld [vmem:[%s2 + $0x18] sm:$0xff]
        %v399 = vld [vmem:[%s2 + $0x20] sm:$0xff]
        %v400 = vld [vmem:[%s2 + $0x28] sm:$0xff]
        %v401 = vld [vmem:[%s2 + $0x30] sm:$0xff]
        %v402 = vld [vmem:[%s2 + $0x38] sm:$0xff]
        %v403 = vld [vmem:[%s2 + $0x40] sm:$0xff]
        %v404 = vld [vmem:[%s2 + $0x48] sm:$0xff]
        %v405 = vld [vmem:[%s2 + $0x50] sm:$0xff]
        %v406 = vld [vmem:[%s2 + $0x58] sm:$0xff]
        %v407 = vld [vmem:[%s3] sm:$0xff]
        %v408 = vld [vmem:[%s3 + $0x8] sm:$0xff]
        %v409 = vld [vmem:[%s3 + $0x10] sm:$0xff]
        %v410 = vld [vmem:[%s3 + $0x18] sm:$0xff]
        %v419 = vlaneseq
        %v420 = vshrl.u32 %v419, 7
        %v421 = vsub.s32 0, %v420
        %v422 = vrot.slane %v387, %v421
        %v423 = vlaneseq
        %v424 = vshrl.u32 %v423, 7
        %v425 = vsub.s32 4, %v424
        %v426 = vrot.slane %v387, %v425
        %v427 = vlaneseq
        %v428 = vshrl.u32 %v427, 7
        %v429 = vsub.s32 0, %v428
        %v430 = vrot.slane %v388, %v429
        %v431 = vlaneseq
        %v432 = vshrl.u32 %v431, 7
        %v433 = vsub.s32 4, %v432
        %v434 = vrot.slane %v388, %v433
        %v435 = vlaneseq
        %v436 = vshrl.u32 %v435, 7
        %v437 = vsub.s32 0, %v436
        %v438 = vrot.slane %v389, %v437
        %v439 = vlaneseq
        %v440 = vshrl.u32 %v439, 7
        %v441 = vsub.s32 4, %v440
        %v442 = vrot.slane %v389, %v441
        %v443 = vlaneseq
        %v444 = vshrl.u32 %v443, 7
        %v445 = vsub.s32 0, %v444
        %v446 = vrot.slane %v390, %v445
        %v447 = vlaneseq
        %v448 = vshrl.u32 %v447, 7
        %v449 = vsub.s32 4, %v448
        %v450 = vrot.slane %v390, %v449
        %v451 = vlaneseq
        %v452 = vshrl.u32 %v451, 7
        %v453 = vsub.s32 0, %v452
        %v454 = vrot.slane %v391, %v453
        %v455 = vlaneseq
        %v456 = vshrl.u32 %v455, 7
        %v457 = vsub.s32 4, %v456
        %v458 = vrot.slane %v391, %v457
        %v459 = vlaneseq
        %v460 = vshrl.u32 %v459, 7
        %v461 = vsub.s32 0, %v460
        %v462 = vrot.slane %v392, %v461
        %v463 = vlaneseq
        %v464 = vshrl.u32 %v463, 7
        %v465 = vsub.s32 4, %v464
        %v466 = vrot.slane %v392, %v465
        %v467 = vlaneseq
        %v468 = vshrl.u32 %v467, 7
        %v469 = vsub.s32 0, %v468
        %v470 = vrot.slane %v393, %v469
        %v471 = vlaneseq
        %v472 = vshrl.u32 %v471, 7
        %v473 = vsub.s32 4, %v472
        %v474 = vrot.slane %v393, %v473
        %v475 = vlaneseq
        %v476 = vshrl.u32 %v475, 7
        %v477 = vsub.s32 0, %v476
        %v478 = vrot.slane %v394, %v477
        %v479 = vlaneseq
        %v480 = vshrl.u32 %v479, 7
        %v481 = vsub.s32 4, %v480
        %v482 = vrot.slane %v394, %v481
        %v499 = vlaneseq
        %v500 = vshrl.u32 %v499, 7
        %v501 = vsub.s32 0, %v500
        %v502 = vrot.slane %v422, %v501
        %v503 = vlaneseq
        %v504 = vshrl.u32 %v503, 7
        %v505 = vsub.s32 0, %v504
        %v506 = vrot.slane %v426, %v505
        %v507 = vlaneseq
        %v508 = vshrl.u32 %v507, 7
        %v509 = vsub.s32 0, %v508
        %v510 = vrot.slane %v430, %v509
        %v511 = vlaneseq
        %v512 = vshrl.u32 %v511, 7
        %v513 = vsub.s32 0, %v512
        %v514 = vrot.slane %v434, %v513
        %v515 = vlaneseq
        %v516 = vshrl.u32 %v515, 7
        %v517 = vsub.s32 0, %v516
        %v518 = vrot.slane %v438, %v517
        %v519 = vlaneseq
        %v520 = vshrl.u32 %v519, 7
        %v521 = vsub.s32 0, %v520
        %v522 = vrot.slane %v442, %v521
        %v523 = vlaneseq
        %v524 = vshrl.u32 %v523, 7
        %v525 = vsub.s32 0, %v524
        %v526 = vrot.slane %v446, %v525
        %v527 = vlaneseq
        %v528 = vshrl.u32 %v527, 7
        %v529 = vsub.s32 0, %v528
        %v530 = vrot.slane %v450, %v529
        %v531 = vlaneseq
        %v532 = vshrl.u32 %v531, 7
        %v533 = vsub.s32 0, %v532
        %v534 = vrot.slane %v454, %v533
        %v535 = vlaneseq
        %v536 = vshrl.u32 %v535, 7
        %v537 = vsub.s32 0, %v536
        %v538 = vrot.slane %v458, %v537
        %v539 = vlaneseq
        %v540 = vshrl.u32 %v539, 7
        %v541 = vsub.s32 0, %v540
        %v542 = vrot.slane %v462, %v541
        %v543 = vlaneseq
        %v544 = vshrl.u32 %v543, 7
        %v545 = vsub.s32 0, %v544
        %v546 = vrot.slane %v466, %v545
        %v547 = vlaneseq
        %v548 = vshrl.u32 %v547, 7
        %v549 = vsub.s32 0, %v548
        %v550 = vrot.slane %v470, %v549
        %v551 = vlaneseq
        %v552 = vshrl.u32 %v551, 7
        %v553 = vsub.s32 0, %v552
        %v554 = vrot.slane %v474, %v553
        %v555 = vlaneseq
        %v556 = vshrl.u32 %v555, 7
        %v557 = vsub.s32 0, %v556
        %v558 = vrot.slane %v478, %v557
        %v559 = vlaneseq
        %v560 = vshrl.u32 %v559, 7
        %v561 = vsub.s32 0, %v560
        %v562 = vrot.slane %v482, %v561
        %564 = vset.pattern.permute.xlu0 0
        %565 = vperm.xlu0 %564, %v395
        %v566 = vpop.permute.xlu0 %565
        %569 = vset.pattern.permute.xlu0 0
        %570 = vperm.xlu0 %569, %v396
        %v571 = vpop.permute.xlu0 %570
        %574 = vset.pattern.permute.xlu0 0
        %575 = vperm.xlu0 %574, %v397
        %v576 = vpop.permute.xlu0 %575
        %579 = vset.pattern.permute.xlu0 0
        %580 = vperm.xlu0 %579, %v398
        %v581 = vpop.permute.xlu0 %580
        %v583 = vmul.f32 %v502, %v566
        %v584 = vmul.f32 %v506, %v566
        %v585 = vmul.f32 %v510, %v566
        %v586 = vmul.f32 %v514, %v566
        %v587 = vmul.f32 %v502, %v571
        %v588 = vmul.f32 %v506, %v571
        %v589 = vmul.f32 %v510, %v571
        %v590 = vmul.f32 %v514, %v571
        %v591 = vmul.f32 %v502, %v576
        %v592 = vmul.f32 %v506, %v576
        %v593 = vmul.f32 %v510, %v576
        %v594 = vmul.f32 %v514, %v576
        %v595 = vmul.f32 %v502, %v581
        %v596 = vmul.f32 %v506, %v581
        %v597 = vmul.f32 %v510, %v581
        %v598 = vmul.f32 %v514, %v581
        %v599 = vmul.f32 %v518, %v566
        %v600 = vmul.f32 %v522, %v566
        %v601 = vmul.f32 %v526, %v566
        %v602 = vmul.f32 %v530, %v566
        %v603 = vmul.f32 %v518, %v571
        %v604 = vmul.f32 %v522, %v571
        %v605 = vmul.f32 %v526, %v571
        %v606 = vmul.f32 %v530, %v571
        %v607 = vmul.f32 %v518, %v576
        %v608 = vmul.f32 %v522, %v576
        %v609 = vmul.f32 %v526, %v576
        %v610 = vmul.f32 %v530, %v576
        %v611 = vmul.f32 %v518, %v581
        %v612 = vmul.f32 %v522, %v581
        %v613 = vmul.f32 %v526, %v581
        %v614 = vmul.f32 %v530, %v581
        %v615 = vmul.f32 %v534, %v566
        %v616 = vmul.f32 %v538, %v566
        %v617 = vmul.f32 %v542, %v566
        %v618 = vmul.f32 %v546, %v566
        %v619 = vmul.f32 %v534, %v571
        %v620 = vmul.f32 %v538, %v571
        %v621 = vmul.f32 %v542, %v571
        %v622 = vmul.f32 %v546, %v571
        %v623 = vmul.f32 %v534, %v576
        %v624 = vmul.f32 %v538, %v576
        %v625 = vmul.f32 %v542, %v576
        %v626 = vmul.f32 %v546, %v576
        %v627 = vmul.f32 %v534, %v581
        %v628 = vmul.f32 %v538, %v581
        %v629 = vmul.f32 %v542, %v581
        %v630 = vmul.f32 %v546, %v581
        %v631 = vmul.f32 %v550, %v566
        %v632 = vmul.f32 %v554, %v566
        %v633 = vmul.f32 %v558, %v566
        %v634 = vmul.f32 %v562, %v566
        %v635 = vmul.f32 %v550, %v571
        %v636 = vmul.f32 %v554, %v571
        %v637 = vmul.f32 %v558, %v571
        %v638 = vmul.f32 %v562, %v571
        %v639 = vmul.f32 %v550, %v576
        %v640 = vmul.f32 %v554, %v576
        %v641 = vmul.f32 %v558, %v576
        %v642 = vmul.f32 %v562, %v576
        %v643 = vmul.f32 %v550, %v581
        %v644 = vmul.f32 %v554, %v581
        %v645 = vmul.f32 %v558, %v581
        %v646 = vmul.f32 %v562, %v581
        %v647 = vlaneseq
        %v648 = vshrl.u32 %v647, 7
        %v649 = vsub.s32 1, %v648
        %v650 = vrot.slane %v387, %v649
        %v651 = vlaneseq
        %v652 = vshrl.u32 %v651, 7
        %v653 = vsub.s32 5, %v652
        %v654 = vrot.slane %v387, %v653
        %v655 = vlaneseq
        %v656 = vshrl.u32 %v655, 7
        %v657 = vsub.s32 1, %v656
        %v658 = vrot.slane %v388, %v657
        %v659 = vlaneseq
        %v660 = vshrl.u32 %v659, 7
        %v661 = vsub.s32 5, %v660
        %v662 = vrot.slane %v388, %v661
        %v663 = vlaneseq
        %v664 = vshrl.u32 %v663, 7
        %v665 = vsub.s32 1, %v664
        %v666 = vrot.slane %v389, %v665
        %v667 = vlaneseq
        %v668 = vshrl.u32 %v667, 7
        %v669 = vsub.s32 5, %v668
        %v670 = vrot.slane %v389, %v669
        %v671 = vlaneseq
        %v672 = vshrl.u32 %v671, 7
        %v673 = vsub.s32 1, %v672
        %v674 = vrot.slane %v390, %v673
        %v675 = vlaneseq
        %v676 = vshrl.u32 %v675, 7
        %v677 = vsub.s32 5, %v676
        %v678 = vrot.slane %v390, %v677
        %v679 = vlaneseq
        %v680 = vshrl.u32 %v679, 7
        %v681 = vsub.s32 1, %v680
        %v682 = vrot.slane %v391, %v681
        %v683 = vlaneseq
        %v684 = vshrl.u32 %v683, 7
        %v685 = vsub.s32 5, %v684
        %v686 = vrot.slane %v391, %v685
        %v687 = vlaneseq
        %v688 = vshrl.u32 %v687, 7
        %v689 = vsub.s32 1, %v688
        %v690 = vrot.slane %v392, %v689
        %v691 = vlaneseq
        %v692 = vshrl.u32 %v691, 7
        %v693 = vsub.s32 5, %v692
        %v694 = vrot.slane %v392, %v693
        %v695 = vlaneseq
        %v696 = vshrl.u32 %v695, 7
        %v697 = vsub.s32 1, %v696
        %v698 = vrot.slane %v393, %v697
        %v699 = vlaneseq
        %v700 = vshrl.u32 %v699, 7
        %v701 = vsub.s32 5, %v700
        %v702 = vrot.slane %v393, %v701
        %v703 = vlaneseq
        %v704 = vshrl.u32 %v703, 7
        %v705 = vsub.s32 1, %v704
        %v706 = vrot.slane %v394, %v705
        %v707 = vlaneseq
        %v708 = vshrl.u32 %v707, 7
        %v709 = vsub.s32 5, %v708
        %v710 = vrot.slane %v394, %v709
        %v727 = vlaneseq
        %v728 = vshrl.u32 %v727, 7
        %v729 = vsub.s32 1, %v728
        %v730 = vrot.slane %v650, %v729
        %v731 = vlaneseq
        %v732 = vshrl.u32 %v731, 7
        %v733 = vsub.s32 1, %v732
        %v734 = vrot.slane %v654, %v733
        %v735 = vlaneseq
        %v736 = vshrl.u32 %v735, 7
        %v737 = vsub.s32 1, %v736
        %v738 = vrot.slane %v658, %v737
        %v739 = vlaneseq
        %v740 = vshrl.u32 %v739, 7
        %v741 = vsub.s32 1, %v740
        %v742 = vrot.slane %v662, %v741
        %v743 = vlaneseq
        %v744 = vshrl.u32 %v743, 7
        %v745 = vsub.s32 1, %v744
        %v746 = vrot.slane %v666, %v745
        %v747 = vlaneseq
        %v748 = vshrl.u32 %v747, 7
        %v749 = vsub.s32 1, %v748
        %v750 = vrot.slane %v670, %v749
        %v751 = vlaneseq
        %v752 = vshrl.u32 %v751, 7
        %v753 = vsub.s32 1, %v752
        %v754 = vrot.slane %v674, %v753
        %v755 = vlaneseq
        %v756 = vshrl.u32 %v755, 7
        %v757 = vsub.s32 1, %v756
        %v758 = vrot.slane %v678, %v757
        %v759 = vlaneseq
        %v760 = vshrl.u32 %v759, 7
        %v761 = vsub.s32 1, %v760
        %v762 = vrot.slane %v682, %v761
        %v763 = vlaneseq
        %v764 = vshrl.u32 %v763, 7
        %v765 = vsub.s32 1, %v764
        %v766 = vrot.slane %v686, %v765
        %v767 = vlaneseq
        %v768 = vshrl.u32 %v767, 7
        %v769 = vsub.s32 1, %v768
        %v770 = vrot.slane %v690, %v769
        %v771 = vlaneseq
        %v772 = vshrl.u32 %v771, 7
        %v773 = vsub.s32 1, %v772
        %v774 = vrot.slane %v694, %v773
        %v775 = vlaneseq
        %v776 = vshrl.u32 %v775, 7
        %v777 = vsub.s32 1, %v776
        %v778 = vrot.slane %v698, %v777
        %v779 = vlaneseq
        %v780 = vshrl.u32 %v779, 7
        %v781 = vsub.s32 1, %v780
        %v782 = vrot.slane %v702, %v781
        %v783 = vlaneseq
        %v784 = vshrl.u32 %v783, 7
        %v785 = vsub.s32 1, %v784
        %v786 = vrot.slane %v706, %v785
        %v787 = vlaneseq
        %v788 = vshrl.u32 %v787, 7
        %v789 = vsub.s32 1, %v788
        %v790 = vrot.slane %v710, %v789
        %792 = vset.pattern.permute.xlu0 0
        %793 = vperm.xlu0 %792, %v399
        %v794 = vpop.permute.xlu0 %793
        %797 = vset.pattern.permute.xlu0 0
        %798 = vperm.xlu0 %797, %v400
        %v799 = vpop.permute.xlu0 %798
        %802 = vset.pattern.permute.xlu0 0
        %803 = vperm.xlu0 %802, %v401
        %v804 = vpop.permute.xlu0 %803
        %807 = vset.pattern.permute.xlu0 0
        %808 = vperm.xlu0 %807, %v402
        %v809 = vpop.permute.xlu0 %808
        %v811 = vmul.f32 %v730, %v794
        %v812 = vmul.f32 %v734, %v794
        %v813 = vmul.f32 %v738, %v794
        %v814 = vmul.f32 %v742, %v794
        %v815 = vmul.f32 %v730, %v799
        %v816 = vmul.f32 %v734, %v799
        %v817 = vmul.f32 %v738, %v799
        %v818 = vmul.f32 %v742, %v799
        %v819 = vmul.f32 %v730, %v804
        %v820 = vmul.f32 %v734, %v804
        %v821 = vmul.f32 %v738, %v804
        %v822 = vmul.f32 %v742, %v804
        %v823 = vmul.f32 %v730, %v809
        %v824 = vmul.f32 %v734, %v809
        %v825 = vmul.f32 %v738, %v809
        %v826 = vmul.f32 %v742, %v809
        %v827 = vmul.f32 %v746, %v794
        %v828 = vmul.f32 %v750, %v794
        %v829 = vmul.f32 %v754, %v794
        %v830 = vmul.f32 %v758, %v794
        %v831 = vmul.f32 %v746, %v799
        %v832 = vmul.f32 %v750, %v799
        %v833 = vmul.f32 %v754, %v799
        %v834 = vmul.f32 %v758, %v799
        %v835 = vmul.f32 %v746, %v804
        %v836 = vmul.f32 %v750, %v804
        %v837 = vmul.f32 %v754, %v804
        %v838 = vmul.f32 %v758, %v804
        %v839 = vmul.f32 %v746, %v809
        %v840 = vmul.f32 %v750, %v809
        %v841 = vmul.f32 %v754, %v809
        %v842 = vmul.f32 %v758, %v809
        %v843 = vmul.f32 %v762, %v794
        %v844 = vmul.f32 %v766, %v794
        %v845 = vmul.f32 %v770, %v794
        %v846 = vmul.f32 %v774, %v794
        %v847 = vmul.f32 %v762, %v799
        %v848 = vmul.f32 %v766, %v799
        %v849 = vmul.f32 %v770, %v799
        %v850 = vmul.f32 %v774, %v799
        %v851 = vmul.f32 %v762, %v804
        %v852 = vmul.f32 %v766, %v804
        %v853 = vmul.f32 %v770, %v804
        %v854 = vmul.f32 %v774, %v804
        %v855 = vmul.f32 %v762, %v809
        %v856 = vmul.f32 %v766, %v809
        %v857 = vmul.f32 %v770, %v809
        %v858 = vmul.f32 %v774, %v809
        %v859 = vmul.f32 %v778, %v794
        %v860 = vmul.f32 %v782, %v794
        %v861 = vmul.f32 %v786, %v794
        %v862 = vmul.f32 %v790, %v794
        %v863 = vmul.f32 %v778, %v799
        %v864 = vmul.f32 %v782, %v799
        %v865 = vmul.f32 %v786, %v799
        %v866 = vmul.f32 %v790, %v799
        %v867 = vmul.f32 %v778, %v804
        %v868 = vmul.f32 %v782, %v804
        %v869 = vmul.f32 %v786, %v804
        %v870 = vmul.f32 %v790, %v804
        %v871 = vmul.f32 %v778, %v809
        %v872 = vmul.f32 %v782, %v809
        %v873 = vmul.f32 %v786, %v809
        %v874 = vmul.f32 %v790, %v809
        %v875 = vadd.f32 %v583, %v811
        %v876 = vadd.f32 %v584, %v812
        %v877 = vadd.f32 %v585, %v813
        %v878 = vadd.f32 %v586, %v814
        %v879 = vadd.f32 %v587, %v815
        %v880 = vadd.f32 %v588, %v816
        %v881 = vadd.f32 %v589, %v817
        %v882 = vadd.f32 %v590, %v818
        %v883 = vadd.f32 %v591, %v819
        %v884 = vadd.f32 %v592, %v820
        %v885 = vadd.f32 %v593, %v821
        %v886 = vadd.f32 %v594, %v822
        %v887 = vadd.f32 %v595, %v823
        %v888 = vadd.f32 %v596, %v824
        %v889 = vadd.f32 %v597, %v825
        %v890 = vadd.f32 %v598, %v826
        %v891 = vadd.f32 %v599, %v827
        %v892 = vadd.f32 %v600, %v828
        %v893 = vadd.f32 %v601, %v829
        %v894 = vadd.f32 %v602, %v830
        %v895 = vadd.f32 %v603, %v831
        %v896 = vadd.f32 %v604, %v832
        %v897 = vadd.f32 %v605, %v833
        %v898 = vadd.f32 %v606, %v834
        %v899 = vadd.f32 %v607, %v835
        %v900 = vadd.f32 %v608, %v836
        %v901 = vadd.f32 %v609, %v837
        %v902 = vadd.f32 %v610, %v838
        %v903 = vadd.f32 %v611, %v839
        %v904 = vadd.f32 %v612, %v840
        %v905 = vadd.f32 %v613, %v841
        %v906 = vadd.f32 %v614, %v842
        %v907 = vadd.f32 %v615, %v843
        %v908 = vadd.f32 %v616, %v844
        %v909 = vadd.f32 %v617, %v845
        %v910 = vadd.f32 %v618, %v846
        %v911 = vadd.f32 %v619, %v847
        %v912 = vadd.f32 %v620, %v848
        %v913 = vadd.f32 %v621, %v849
        %v914 = vadd.f32 %v622, %v850
        %v915 = vadd.f32 %v623, %v851
        %v916 = vadd.f32 %v624, %v852
        %v917 = vadd.f32 %v625, %v853
        %v918 = vadd.f32 %v626, %v854
        %v919 = vadd.f32 %v627, %v855
        %v920 = vadd.f32 %v628, %v856
        %v921 = vadd.f32 %v629, %v857
        %v922 = vadd.f32 %v630, %v858
        %v923 = vadd.f32 %v631, %v859
        %v924 = vadd.f32 %v632, %v860
        %v925 = vadd.f32 %v633, %v861
        %v926 = vadd.f32 %v634, %v862
        %v927 = vadd.f32 %v635, %v863
        %v928 = vadd.f32 %v636, %v864
        %v929 = vadd.f32 %v637, %v865
        %v930 = vadd.f32 %v638, %v866
        %v931 = vadd.f32 %v639, %v867
        %v932 = vadd.f32 %v640, %v868
        %v933 = vadd.f32 %v641, %v869
        %v934 = vadd.f32 %v642, %v870
        %v935 = vadd.f32 %v643, %v871
        %v936 = vadd.f32 %v644, %v872
        %v937 = vadd.f32 %v645, %v873
        %v938 = vadd.f32 %v646, %v874
        %v939 = vlaneseq
        %v940 = vshrl.u32 %v939, 7
        %v941 = vsub.s32 2, %v940
        %v942 = vrot.slane %v387, %v941
        %v943 = vlaneseq
        %v944 = vshrl.u32 %v943, 7
        %v945 = vsub.s32 6, %v944
        %v946 = vrot.slane %v387, %v945
        %v947 = vlaneseq
        %v948 = vshrl.u32 %v947, 7
        %v949 = vsub.s32 2, %v948
        %v950 = vrot.slane %v388, %v949
        %v951 = vlaneseq
        %v952 = vshrl.u32 %v951, 7
        %v953 = vsub.s32 6, %v952
        %v954 = vrot.slane %v388, %v953
        %v955 = vlaneseq
        %v956 = vshrl.u32 %v955, 7
        %v957 = vsub.s32 2, %v956
        %v958 = vrot.slane %v389, %v957
        %v959 = vlaneseq
        %v960 = vshrl.u32 %v959, 7
        %v961 = vsub.s32 6, %v960
        %v962 = vrot.slane %v389, %v961
        %v963 = vlaneseq
        %v964 = vshrl.u32 %v963, 7
        %v965 = vsub.s32 2, %v964
        %v966 = vrot.slane %v390, %v965
        %v967 = vlaneseq
        %v968 = vshrl.u32 %v967, 7
        %v969 = vsub.s32 6, %v968
        %v970 = vrot.slane %v390, %v969
        %v971 = vlaneseq
        %v972 = vshrl.u32 %v971, 7
        %v973 = vsub.s32 2, %v972
        %v974 = vrot.slane %v391, %v973
        %v975 = vlaneseq
        %v976 = vshrl.u32 %v975, 7
        %v977 = vsub.s32 6, %v976
        %v978 = vrot.slane %v391, %v977
        %v979 = vlaneseq
        %v980 = vshrl.u32 %v979, 7
        %v981 = vsub.s32 2, %v980
        %v982 = vrot.slane %v392, %v981
        %v983 = vlaneseq
        %v984 = vshrl.u32 %v983, 7
        %v985 = vsub.s32 6, %v984
        %v986 = vrot.slane %v392, %v985
        %v987 = vlaneseq
        %v988 = vshrl.u32 %v987, 7
        %v989 = vsub.s32 2, %v988
        %v990 = vrot.slane %v393, %v989
        %v991 = vlaneseq
        %v992 = vshrl.u32 %v991, 7
        %v993 = vsub.s32 6, %v992
        %v994 = vrot.slane %v393, %v993
        %v995 = vlaneseq
        %v996 = vshrl.u32 %v995, 7
        %v997 = vsub.s32 2, %v996
        %v998 = vrot.slane %v394, %v997
        %v999 = vlaneseq
        %v1000 = vshrl.u32 %v999, 7
        %v1001 = vsub.s32 6, %v1000
        %v1002 = vrot.slane %v394, %v1001
        %v1019 = vlaneseq
        %v1020 = vshrl.u32 %v1019, 7
        %v1021 = vsub.s32 2, %v1020
        %v1022 = vrot.slane %v942, %v1021
        %v1023 = vlaneseq
        %v1024 = vshrl.u32 %v1023, 7
        %v1025 = vsub.s32 2, %v1024
        %v1026 = vrot.slane %v946, %v1025
        %v1027 = vlaneseq
        %v1028 = vshrl.u32 %v1027, 7
        %v1029 = vsub.s32 2, %v1028
        %v1030 = vrot.slane %v950, %v1029
        %v1031 = vlaneseq
        %v1032 = vshrl.u32 %v1031, 7
        %v1033 = vsub.s32 2, %v1032
        %v1034 = vrot.slane %v954, %v1033
        %v1035 = vlaneseq
        %v1036 = vshrl.u32 %v1035, 7
        %v1037 = vsub.s32 2, %v1036
        %v1038 = vrot.slane %v958, %v1037
        %v1039 = vlaneseq
        %v1040 = vshrl.u32 %v1039, 7
        %v1041 = vsub.s32 2, %v1040
        %v1042 = vrot.slane %v962, %v1041
        %v1043 = vlaneseq
        %v1044 = vshrl.u32 %v1043, 7
        %v1045 = vsub.s32 2, %v1044
        %v1046 = vrot.slane %v966, %v1045
        %v1047 = vlaneseq
        %v1048 = vshrl.u32 %v1047, 7
        %v1049 = vsub.s32 2, %v1048
        %v1050 = vrot.slane %v970, %v1049
        %v1051 = vlaneseq
        %v1052 = vshrl.u32 %v1051, 7
        %v1053 = vsub.s32 2, %v1052
        %v1054 = vrot.slane %v974, %v1053
        %v1055 = vlaneseq
        %v1056 = vshrl.u32 %v1055, 7
        %v1057 = vsub.s32 2, %v1056
        %v1058 = vrot.slane %v978, %v1057
        %v1059 = vlaneseq
        %v1060 = vshrl.u32 %v1059, 7
        %v1061 = vsub.s32 2, %v1060
        %v1062 = vrot.slane %v982, %v1061
        %v1063 = vlaneseq
        %v1064 = vshrl.u32 %v1063, 7
        %v1065 = vsub.s32 2, %v1064
        %v1066 = vrot.slane %v986, %v1065
        %v1067 = vlaneseq
        %v1068 = vshrl.u32 %v1067, 7
        %v1069 = vsub.s32 2, %v1068
        %v1070 = vrot.slane %v990, %v1069
        %v1071 = vlaneseq
        %v1072 = vshrl.u32 %v1071, 7
        %v1073 = vsub.s32 2, %v1072
        %v1074 = vrot.slane %v994, %v1073
        %v1075 = vlaneseq
        %v1076 = vshrl.u32 %v1075, 7
        %v1077 = vsub.s32 2, %v1076
        %v1078 = vrot.slane %v998, %v1077
        %v1079 = vlaneseq
        %v1080 = vshrl.u32 %v1079, 7
        %v1081 = vsub.s32 2, %v1080
        %v1082 = vrot.slane %v1002, %v1081
        %1084 = vset.pattern.permute.xlu0 0
        %1085 = vperm.xlu0 %1084, %v403
        %v1086 = vpop.permute.xlu0 %1085
        %1089 = vset.pattern.permute.xlu0 0
        %1090 = vperm.xlu0 %1089, %v404
        %v1091 = vpop.permute.xlu0 %1090
        %1094 = vset.pattern.permute.xlu0 0
        %1095 = vperm.xlu0 %1094, %v405
        %v1096 = vpop.permute.xlu0 %1095
        %1099 = vset.pattern.permute.xlu0 0
        %1100 = vperm.xlu0 %1099, %v406
        %v1101 = vpop.permute.xlu0 %1100
        %v1103 = vmul.f32 %v1022, %v1086
        %v1104 = vmul.f32 %v1026, %v1086
        %v1105 = vmul.f32 %v1030, %v1086
        %v1106 = vmul.f32 %v1034, %v1086
        %v1107 = vmul.f32 %v1022, %v1091
        %v1108 = vmul.f32 %v1026, %v1091
        %v1109 = vmul.f32 %v1030, %v1091
        %v1110 = vmul.f32 %v1034, %v1091
        %v1111 = vmul.f32 %v1022, %v1096
        %v1112 = vmul.f32 %v1026, %v1096
        %v1113 = vmul.f32 %v1030, %v1096
        %v1114 = vmul.f32 %v1034, %v1096
        %v1115 = vmul.f32 %v1022, %v1101
        %v1116 = vmul.f32 %v1026, %v1101
        %v1117 = vmul.f32 %v1030, %v1101
        %v1118 = vmul.f32 %v1034, %v1101
        %v1119 = vmul.f32 %v1038, %v1086
        %v1120 = vmul.f32 %v1042, %v1086
        %v1121 = vmul.f32 %v1046, %v1086
        %v1122 = vmul.f32 %v1050, %v1086
        %v1123 = vmul.f32 %v1038, %v1091
        %v1124 = vmul.f32 %v1042, %v1091
        %v1125 = vmul.f32 %v1046, %v1091
        %v1126 = vmul.f32 %v1050, %v1091
        %v1127 = vmul.f32 %v1038, %v1096
        %v1128 = vmul.f32 %v1042, %v1096
        %v1129 = vmul.f32 %v1046, %v1096
        %v1130 = vmul.f32 %v1050, %v1096
        %v1131 = vmul.f32 %v1038, %v1101
        %v1132 = vmul.f32 %v1042, %v1101
        %v1133 = vmul.f32 %v1046, %v1101
        %v1134 = vmul.f32 %v1050, %v1101
        %v1135 = vmul.f32 %v1054, %v1086
        %v1136 = vmul.f32 %v1058, %v1086
        %v1137 = vmul.f32 %v1062, %v1086
        %v1138 = vmul.f32 %v1066, %v1086
        %v1139 = vmul.f32 %v1054, %v1091
        %v1140 = vmul.f32 %v1058, %v1091
        %v1141 = vmul.f32 %v1062, %v1091
        %v1142 = vmul.f32 %v1066, %v1091
        %v1143 = vmul.f32 %v1054, %v1096
        %v1144 = vmul.f32 %v1058, %v1096
        %v1145 = vmul.f32 %v1062, %v1096
        %v1146 = vmul.f32 %v1066, %v1096
        %v1147 = vmul.f32 %v1054, %v1101
        %v1148 = vmul.f32 %v1058, %v1101
        %v1149 = vmul.f32 %v1062, %v1101
        %v1150 = vmul.f32 %v1066, %v1101
        %v1151 = vmul.f32 %v1070, %v1086
        %v1152 = vmul.f32 %v1074, %v1086
        %v1153 = vmul.f32 %v1078, %v1086
        %v1154 = vmul.f32 %v1082, %v1086
        %v1155 = vmul.f32 %v1070, %v1091
        %v1156 = vmul.f32 %v1074, %v1091
        %v1157 = vmul.f32 %v1078, %v1091
        %v1158 = vmul.f32 %v1082, %v1091
        %v1159 = vmul.f32 %v1070, %v1096
        %v1160 = vmul.f32 %v1074, %v1096
        %v1161 = vmul.f32 %v1078, %v1096
        %v1162 = vmul.f32 %v1082, %v1096
        %v1163 = vmul.f32 %v1070, %v1101
        %v1164 = vmul.f32 %v1074, %v1101
        %v1165 = vmul.f32 %v1078, %v1101
        %v1166 = vmul.f32 %v1082, %v1101
        %v1167 = vadd.f32 %v875, %v1103
        %v1168 = vadd.f32 %v876, %v1104
        %v1169 = vadd.f32 %v877, %v1105
        %v1170 = vadd.f32 %v878, %v1106
        %v1171 = vadd.f32 %v879, %v1107
        %v1172 = vadd.f32 %v880, %v1108
        %v1173 = vadd.f32 %v881, %v1109
        %v1174 = vadd.f32 %v882, %v1110
        %v1175 = vadd.f32 %v883, %v1111
        %v1176 = vadd.f32 %v884, %v1112
        %v1177 = vadd.f32 %v885, %v1113
        %v1178 = vadd.f32 %v886, %v1114
        %v1179 = vadd.f32 %v887, %v1115
        %v1180 = vadd.f32 %v888, %v1116
        %v1181 = vadd.f32 %v889, %v1117
        %v1182 = vadd.f32 %v890, %v1118
        %v1183 = vadd.f32 %v891, %v1119
        %v1184 = vadd.f32 %v892, %v1120
        %v1185 = vadd.f32 %v893, %v1121
        %v1186 = vadd.f32 %v894, %v1122
        %v1187 = vadd.f32 %v895, %v1123
        %v1188 = vadd.f32 %v896, %v1124
        %v1189 = vadd.f32 %v897, %v1125
        %v1190 = vadd.f32 %v898, %v1126
        %v1191 = vadd.f32 %v899, %v1127
        %v1192 = vadd.f32 %v900, %v1128
        %v1193 = vadd.f32 %v901, %v1129
        %v1194 = vadd.f32 %v902, %v1130
        %v1195 = vadd.f32 %v903, %v1131
        %v1196 = vadd.f32 %v904, %v1132
        %v1197 = vadd.f32 %v905, %v1133
        %v1198 = vadd.f32 %v906, %v1134
        %v1199 = vadd.f32 %v907, %v1135
        %v1200 = vadd.f32 %v908, %v1136
        %v1201 = vadd.f32 %v909, %v1137
        %v1202 = vadd.f32 %v910, %v1138
        %v1203 = vadd.f32 %v911, %v1139
        %v1204 = vadd.f32 %v912, %v1140
        %v1205 = vadd.f32 %v913, %v1141
        %v1206 = vadd.f32 %v914, %v1142
        %v1207 = vadd.f32 %v915, %v1143
        %v1208 = vadd.f32 %v916, %v1144
        %v1209 = vadd.f32 %v917, %v1145
        %v1210 = vadd.f32 %v918, %v1146
        %v1211 = vadd.f32 %v919, %v1147
        %v1212 = vadd.f32 %v920, %v1148
        %v1213 = vadd.f32 %v921, %v1149
        %v1214 = vadd.f32 %v922, %v1150
        %v1215 = vadd.f32 %v923, %v1151
        %v1216 = vadd.f32 %v924, %v1152
        %v1217 = vadd.f32 %v925, %v1153
        %v1218 = vadd.f32 %v926, %v1154
        %v1219 = vadd.f32 %v927, %v1155
        %v1220 = vadd.f32 %v928, %v1156
        %v1221 = vadd.f32 %v929, %v1157
        %v1222 = vadd.f32 %v930, %v1158
        %v1223 = vadd.f32 %v931, %v1159
        %v1224 = vadd.f32 %v932, %v1160
        %v1225 = vadd.f32 %v933, %v1161
        %v1226 = vadd.f32 %v934, %v1162
        %v1227 = vadd.f32 %v935, %v1163
        %v1228 = vadd.f32 %v936, %v1164
        %v1229 = vadd.f32 %v937, %v1165
        %v1230 = vadd.f32 %v938, %v1166
        %1232 = vset.pattern.permute.xlu0 0
        %1233 = vperm.xlu0 %1232, %v407
        %v1234 = vpop.permute.xlu0 %1233
        %1237 = vset.pattern.permute.xlu0 0
        %1238 = vperm.xlu0 %1237, %v408
        %v1239 = vpop.permute.xlu0 %1238
        %1242 = vset.pattern.permute.xlu0 0
        %1243 = vperm.xlu0 %1242, %v409
        %v1244 = vpop.permute.xlu0 %1243
        %1247 = vset.pattern.permute.xlu0 0
        %1248 = vperm.xlu0 %1247, %v410
        %v1249 = vpop.permute.xlu0 %1248
        %v1251 = vadd.f32 %v1167, %v1234
        %v1252 = vadd.f32 %v1168, %v1234
        %v1253 = vadd.f32 %v1169, %v1234
        %v1254 = vadd.f32 %v1170, %v1234
        %v1255 = vadd.f32 %v1171, %v1239
        %v1256 = vadd.f32 %v1172, %v1239
        %v1257 = vadd.f32 %v1173, %v1239
        %v1258 = vadd.f32 %v1174, %v1239
        %v1259 = vadd.f32 %v1175, %v1244
        %v1260 = vadd.f32 %v1176, %v1244
        %v1261 = vadd.f32 %v1177, %v1244
        %v1262 = vadd.f32 %v1178, %v1244
        %v1263 = vadd.f32 %v1179, %v1249
        %v1264 = vadd.f32 %v1180, %v1249
        %v1265 = vadd.f32 %v1181, %v1249
        %v1266 = vadd.f32 %v1182, %v1249
        %v1267 = vadd.f32 %v1183, %v1234
        %v1268 = vadd.f32 %v1184, %v1234
        %v1269 = vadd.f32 %v1185, %v1234
        %v1270 = vadd.f32 %v1186, %v1234
        %v1271 = vadd.f32 %v1187, %v1239
        %v1272 = vadd.f32 %v1188, %v1239
        %v1273 = vadd.f32 %v1189, %v1239
        %v1274 = vadd.f32 %v1190, %v1239
        %v1275 = vadd.f32 %v1191, %v1244
        %v1276 = vadd.f32 %v1192, %v1244
        %v1277 = vadd.f32 %v1193, %v1244
        %v1278 = vadd.f32 %v1194, %v1244
        %v1279 = vadd.f32 %v1195, %v1249
        %v1280 = vadd.f32 %v1196, %v1249
        %v1281 = vadd.f32 %v1197, %v1249
        %v1282 = vadd.f32 %v1198, %v1249
        %v1283 = vadd.f32 %v1199, %v1234
        %v1284 = vadd.f32 %v1200, %v1234
        %v1285 = vadd.f32 %v1201, %v1234
        %v1286 = vadd.f32 %v1202, %v1234
        %v1287 = vadd.f32 %v1203, %v1239
        %v1288 = vadd.f32 %v1204, %v1239
        %v1289 = vadd.f32 %v1205, %v1239
        %v1290 = vadd.f32 %v1206, %v1239
        %v1291 = vadd.f32 %v1207, %v1244
        %v1292 = vadd.f32 %v1208, %v1244
        %v1293 = vadd.f32 %v1209, %v1244
        %v1294 = vadd.f32 %v1210, %v1244
        %v1295 = vadd.f32 %v1211, %v1249
        %v1296 = vadd.f32 %v1212, %v1249
        %v1297 = vadd.f32 %v1213, %v1249
        %v1298 = vadd.f32 %v1214, %v1249
        %v1299 = vadd.f32 %v1215, %v1234
        %v1300 = vadd.f32 %v1216, %v1234
        %v1301 = vadd.f32 %v1217, %v1234
        %v1302 = vadd.f32 %v1218, %v1234
        %v1303 = vadd.f32 %v1219, %v1239
        %v1304 = vadd.f32 %v1220, %v1239
        %v1305 = vadd.f32 %v1221, %v1239
        %v1306 = vadd.f32 %v1222, %v1239
        %v1307 = vadd.f32 %v1223, %v1244
        %v1308 = vadd.f32 %v1224, %v1244
        %v1309 = vadd.f32 %v1225, %v1244
        %v1310 = vadd.f32 %v1226, %v1244
        %v1311 = vadd.f32 %v1227, %v1249
        %v1312 = vadd.f32 %v1228, %v1249
        %v1313 = vadd.f32 %v1229, %v1249
        %v1314 = vadd.f32 %v1230, %v1249
        %v1315 = vmax.f32 %v1251, 0.0
        %v1316 = vmax.f32 %v1252, 0.0
        %v1317 = vmax.f32 %v1253, 0.0
        %v1318 = vmax.f32 %v1254, 0.0
        %v1319 = vmax.f32 %v1255, 0.0
        %v1320 = vmax.f32 %v1256, 0.0
        %v1321 = vmax.f32 %v1257, 0.0
        %v1322 = vmax.f32 %v1258, 0.0
        %v1323 = vmax.f32 %v1259, 0.0
        %v1324 = vmax.f32 %v1260, 0.0
        %v1325 = vmax.f32 %v1261, 0.0
        %v1326 = vmax.f32 %v1262, 0.0
        %v1327 = vmax.f32 %v1263, 0.0
        %v1328 = vmax.f32 %v1264, 0.0
        %v1329 = vmax.f32 %v1265, 0.0
        %v1330 = vmax.f32 %v1266, 0.0
        %v1331 = vmax.f32 %v1267, 0.0
        %v1332 = vmax.f32 %v1268, 0.0
        %v1333 = vmax.f32 %v1269, 0.0
        %v1334 = vmax.f32 %v1270, 0.0
        %v1335 = vmax.f32 %v1271, 0.0
        %v1336 = vmax.f32 %v1272, 0.0
        %v1337 = vmax.f32 %v1273, 0.0
        %v1338 = vmax.f32 %v1274, 0.0
        %v1339 = vmax.f32 %v1275, 0.0
        %v1340 = vmax.f32 %v1276, 0.0
        %v1341 = vmax.f32 %v1277, 0.0
        %v1342 = vmax.f32 %v1278, 0.0
        %v1343 = vmax.f32 %v1279, 0.0
        %v1344 = vmax.f32 %v1280, 0.0
        %v1345 = vmax.f32 %v1281, 0.0
        %v1346 = vmax.f32 %v1282, 0.0
        %v1347 = vmax.f32 %v1283, 0.0
        %v1348 = vmax.f32 %v1284, 0.0
        %v1349 = vmax.f32 %v1285, 0.0
        %v1350 = vmax.f32 %v1286, 0.0
        %v1351 = vmax.f32 %v1287, 0.0
        %v1352 = vmax.f32 %v1288, 0.0
        %v1353 = vmax.f32 %v1289, 0.0
        %v1354 = vmax.f32 %v1290, 0.0
        %v1355 = vmax.f32 %v1291, 0.0
        %v1356 = vmax.f32 %v1292, 0.0
        %v1357 = vmax.f32 %v1293, 0.0
        %v1358 = vmax.f32 %v1294, 0.0
        %v1359 = vmax.f32 %v1295, 0.0
        %v1360 = vmax.f32 %v1296, 0.0
        %v1361 = vmax.f32 %v1297, 0.0
        %v1362 = vmax.f32 %v1298, 0.0
        %v1363 = vmax.f32 %v1299, 0.0
        %v1364 = vmax.f32 %v1300, 0.0
        %v1365 = vmax.f32 %v1301, 0.0
        %v1366 = vmax.f32 %v1302, 0.0
        %v1367 = vmax.f32 %v1303, 0.0
        %v1368 = vmax.f32 %v1304, 0.0
        %v1369 = vmax.f32 %v1305, 0.0
        %v1370 = vmax.f32 %v1306, 0.0
        %v1371 = vmax.f32 %v1307, 0.0
        %v1372 = vmax.f32 %v1308, 0.0
        %v1373 = vmax.f32 %v1309, 0.0
        %v1374 = vmax.f32 %v1310, 0.0
        %v1375 = vmax.f32 %v1311, 0.0
        %v1376 = vmax.f32 %v1312, 0.0
        %v1377 = vmax.f32 %v1313, 0.0
        %v1378 = vmax.f32 %v1314, 0.0
        %v1379 = vadd.f32 %v1315, %v1316
        %v1380 = vadd.f32 %v1379, %v1317
        %v1381 = vadd.f32 %v1380, %v1318
        %1382 = vadd.xlane.f32.xlu0 %v1381
        %v1383 = vpop.xlane.xlu0 %1382
        %v1384 = vadd.f32 %v1319, %v1320
        %v1385 = vadd.f32 %v1384, %v1321
        %v1386 = vadd.f32 %v1385, %v1322
        %1387 = vadd.xlane.f32.xlu0 %v1386
        %v1388 = vpop.xlane.xlu0 %1387
        %v1389 = vadd.f32 %v1323, %v1324
        %v1390 = vadd.f32 %v1389, %v1325
        %v1391 = vadd.f32 %v1390, %v1326
        %1392 = vadd.xlane.f32.xlu0 %v1391
        %v1393 = vpop.xlane.xlu0 %1392
        %v1394 = vadd.f32 %v1327, %v1328
        %v1395 = vadd.f32 %v1394, %v1329
        %v1396 = vadd.f32 %v1395, %v1330
        %1397 = vadd.xlane.f32.xlu0 %v1396
        %v1398 = vpop.xlane.xlu0 %1397
        %v1399 = vadd.f32 %v1331, %v1332
        %v1400 = vadd.f32 %v1399, %v1333
        %v1401 = vadd.f32 %v1400, %v1334
        %1402 = vadd.xlane.f32.xlu0 %v1401
        %v1403 = vpop.xlane.xlu0 %1402
        %v1404 = vadd.f32 %v1335, %v1336
        %v1405 = vadd.f32 %v1404, %v1337
        %v1406 = vadd.f32 %v1405, %v1338
        %1407 = vadd.xlane.f32.xlu0 %v1406
        %v1408 = vpop.xlane.xlu0 %1407
        %v1409 = vadd.f32 %v1339, %v1340
        %v1410 = vadd.f32 %v1409, %v1341
        %v1411 = vadd.f32 %v1410, %v1342
        %1412 = vadd.xlane.f32.xlu0 %v1411
        %v1413 = vpop.xlane.xlu0 %1412
        %v1414 = vadd.f32 %v1343, %v1344
        %v1415 = vadd.f32 %v1414, %v1345
        %v1416 = vadd.f32 %v1415, %v1346
        %1417 = vadd.xlane.f32.xlu0 %v1416
        %v1418 = vpop.xlane.xlu0 %1417
        %v1419 = vadd.f32 %v1347, %v1348
        %v1420 = vadd.f32 %v1419, %v1349
        %v1421 = vadd.f32 %v1420, %v1350
        %1422 = vadd.xlane.f32.xlu0 %v1421
        %v1423 = vpop.xlane.xlu0 %1422
        %v1424 = vadd.f32 %v1351, %v1352
        %v1425 = vadd.f32 %v1424, %v1353
        %v1426 = vadd.f32 %v1425, %v1354
        %1427 = vadd.xlane.f32.xlu0 %v1426
        %v1428 = vpop.xlane.xlu0 %1427
        %v1429 = vadd.f32 %v1355, %v1356
        %v1430 = vadd.f32 %v1429, %v1357
        %v1431 = vadd.f32 %v1430, %v1358
        %1432 = vadd.xlane.f32.xlu0 %v1431
        %v1433 = vpop.xlane.xlu0 %1432
        %v1434 = vadd.f32 %v1359, %v1360
        %v1435 = vadd.f32 %v1434, %v1361
        %v1436 = vadd.f32 %v1435, %v1362
        %1437 = vadd.xlane.f32.xlu0 %v1436
        %v1438 = vpop.xlane.xlu0 %1437
        %v1439 = vadd.f32 %v1363, %v1364
        %v1440 = vadd.f32 %v1439, %v1365
        %v1441 = vadd.f32 %v1440, %v1366
        %1442 = vadd.xlane.f32.xlu0 %v1441
        %v1443 = vpop.xlane.xlu0 %1442
        %v1444 = vadd.f32 %v1367, %v1368
        %v1445 = vadd.f32 %v1444, %v1369
        %v1446 = vadd.f32 %v1445, %v1370
        %1447 = vadd.xlane.f32.xlu0 %v1446
        %v1448 = vpop.xlane.xlu0 %1447
        %v1449 = vadd.f32 %v1371, %v1372
        %v1450 = vadd.f32 %v1449, %v1373
        %v1451 = vadd.f32 %v1450, %v1374
        %1452 = vadd.xlane.f32.xlu0 %v1451
        %v1453 = vpop.xlane.xlu0 %1452
        %v1454 = vadd.f32 %v1375, %v1376
        %v1455 = vadd.f32 %v1454, %v1377
        %v1456 = vadd.f32 %v1455, %v1378
        %1457 = vadd.xlane.f32.xlu0 %v1456
        %v1458 = vpop.xlane.xlu0 %1457
        %v1475 = vlaneseq
        %v1476 = vand.u32 %v1475, 127
        %v1477 = vlaneseq
        %v1478 = vshrl.u32 %v1477, 7
        %v1479 = vsub.s32 %v1476, %v1478
        %v1480 = vrot.slane %v1383, %v1479
        %v1481 = vadd.s32 %v1476, 4294967288
        %v1482 = vlaneseq
        %v1483 = vshrl.u32 %v1482, 7
        %v1484 = vsub.s32 %v1481, %v1483
        %v1485 = vrot.slane %v1388, %v1484
        %vm1486 = vcmask 130112
        %v1487 = vsel %vm1486, %v1485, %v1480
        %v1488 = vadd.s32 %v1476, 4294967280
        %v1489 = vlaneseq
        %v1490 = vshrl.u32 %v1489, 7
        %v1491 = vsub.s32 %v1488, %v1490
        %v1492 = vrot.slane %v1393, %v1491
        %vm1493 = vcmask 195712
        %v1494 = vsel %vm1493, %v1492, %v1487
        %v1495 = vadd.s32 %v1476, 4294967272
        %v1496 = vlaneseq
        %v1497 = vshrl.u32 %v1496, 7
        %v1498 = vsub.s32 %v1495, %v1497
        %v1499 = vrot.slane %v1398, %v1498
        %vm1500 = vcmask 261312
        %v1501 = vsel %vm1500, %v1499, %v1494
        %v1502 = vlaneseq
        %v1503 = vshrl.u32 %v1502, 7
        %v1504 = vsub.s32 %v1476, %v1503
        %v1505 = vrot.slane %v1403, %v1504
        %v1506 = vlaneseq
        %v1507 = vshrl.u32 %v1506, 7
        %v1508 = vsub.s32 %v1481, %v1507
        %v1509 = vrot.slane %v1408, %v1508
        %v1510 = vsel %vm1486, %v1509, %v1505
        %v1511 = vlaneseq
        %v1512 = vshrl.u32 %v1511, 7
        %v1513 = vsub.s32 %v1488, %v1512
        %v1514 = vrot.slane %v1413, %v1513
        %v1515 = vsel %vm1493, %v1514, %v1510
        %v1516 = vlaneseq
        %v1517 = vshrl.u32 %v1516, 7
        %v1518 = vsub.s32 %v1495, %v1517
        %v1519 = vrot.slane %v1418, %v1518
        %v1520 = vsel %vm1500, %v1519, %v1515
        %v1521 = vlaneseq
        %v1522 = vshrl.u32 %v1521, 7
        %v1523 = vsub.s32 %v1476, %v1522
        %v1524 = vrot.slane %v1423, %v1523
        %v1525 = vlaneseq
        %v1526 = vshrl.u32 %v1525, 7
        %v1527 = vsub.s32 %v1481, %v1526
        %v1528 = vrot.slane %v1428, %v1527
        %v1529 = vsel %vm1486, %v1528, %v1524
        %v1530 = vlaneseq
        %v1531 = vshrl.u32 %v1530, 7
        %v1532 = vsub.s32 %v1488, %v1531
        %v1533 = vrot.slane %v1433, %v1532
        %v1534 = vsel %vm1493, %v1533, %v1529
        %v1535 = vlaneseq
        %v1536 = vshrl.u32 %v1535, 7
        %v1537 = vsub.s32 %v1495, %v1536
        %v1538 = vrot.slane %v1438, %v1537
        %v1539 = vsel %vm1500, %v1538, %v1534
        %v1540 = vlaneseq
        %v1541 = vshrl.u32 %v1540, 7
        %v1542 = vsub.s32 %v1476, %v1541
        %v1543 = vrot.slane %v1443, %v1542
        %v1544 = vlaneseq
        %v1545 = vshrl.u32 %v1544, 7
        %v1546 = vsub.s32 %v1481, %v1545
        %v1547 = vrot.slane %v1448, %v1546
        %v1548 = vsel %vm1486, %v1547, %v1543
        %v1549 = vlaneseq
        %v1550 = vshrl.u32 %v1549, 7
        %v1551 = vsub.s32 %v1488, %v1550
        %v1552 = vrot.slane %v1453, %v1551
        %v1553 = vsel %vm1493, %v1552, %v1548
        %v1554 = vlaneseq
        %v1555 = vshrl.u32 %v1554, 7
        %v1556 = vsub.s32 %v1495, %v1555
        %v1557 = vrot.slane %v1458, %v1556
        %v1558 = vsel %vm1500, %v1557, %v1553
        %vm1559 = vcmask 1041409
        %v1560 = vsel %vm1559, %v1520, %v1501
        %vm1561 = vcmask 1042434
        %v1562 = vsel %vm1561, %v1539, %v1560
        %vm1563 = vcmask 1043459
        %v1564 = vsel %vm1563, %v1558, %v1562
        %v1566 = vadd.f32 %v386, %v1564
        %vm1567 = vcmask 257024
        %1568 = vst.msk [vmem:[#allocation2] sm:$0xf] %vm1567, %v1566
        %p1569 = scmp.eq.s32.totalorder %s21, 1
        // Predicated region
        $region88: #{shopee_forward.2} parent=78 // pred_check
          %p1570 = pneg %p1569
        $region89: #{shopee_forward.2} parent=78 // pred_check_branch
          %1572 = sbr.rel (%p1570) target = $region91
        $region90: #{shopee_forward.2} parent=78 // pred_region
          %v1573 = vld [vmem:[#allocation2] sm:$0xf]
          %v1574 = vmul.f32 %v1573, 0.0009765625
          %v1575 = vld [vmem:[%s1] sm:$0xf]
          %v1576 = vld [vmem:[%s4] sm:$0xff]
          %v1577 = vld [vmem:[%s4 + $0x8] sm:$0xff]
          %v1578 = vld [vmem:[%s4 + $0x10] sm:$0xff]
          %v1579 = vld [vmem:[%s4 + $0x18] sm:$0xff]
          %v1580 = vld [vmem:[%s5] sm:$0x1]
          %v1582 = vlaneseq
          %v1583 = vshrl.u32 %v1582, 7
          %v1584 = vsub.s32 0, %v1583
          %v1585 = vrot.slane %v1580, %v1584
          %vm1587 = vcmask 261120
          %v1589 = vsel %vm1587, %v1575, 0
          %1591 = vmatprep.subr.mxu0 0.0
          %1592 = vmatpush1.msra.mxu0 %v1576
          %1593 = vmatprep.subr.mxu0 0.0
          %1594 = vmatpush1.msra.mxu0 %v1577
          %1595 = vmatprep.subr.mxu0 0.0
          %1596 = vmatpush1.msra.mxu0 %v1578
          %1597 = vmatprep.subr.mxu0 0.0
          %1598 = vmatpush1.msra.mxu0 %v1579
          %1599 = vmatprep.subr.mxu0 0.0
          %1600 = vmatpush1.msra.mxu0 0.0
          %1601 = vmatprep.subr.mxu0 0.0
          %1602 = vmatpush1.msra.mxu0 0.0
          %1603 = vmatprep.subr.mxu0 0.0
          %1604 = vmatpush1.msra.mxu0 0.0
          %1605 = vmatprep.subr.mxu0 0.0
          %1606 = vmatpush1.msra.mxu0 0.0
          %1607 = vmatprep.subr.mxu0 0.0
          %1608 = vmatpush1.msra.mxu0 0.0
          %1609 = vmatprep.subr.mxu0 0.0
          %1610 = vmatpush1.msra.mxu0 0.0
          %1611 = vmatprep.subr.mxu0 0.0
          %1612 = vmatpush1.msra.mxu0 0.0
          %1613 = vmatprep.subr.mxu0 0.0
          %1614 = vmatpush1.msra.mxu0 0.0
          %1615 = vmatprep.subr.mxu0 0.0
          %1616 = vmatpush1.msra.mxu0 0.0
          %1617 = vmatprep.subr.mxu0 0.0
          %1618 = vmatpush1.msra.mxu0 0.0
          %1619 = vmatprep.subr.mxu0 0.0
          %1620 = vmatpush1.msra.mxu0 0.0
          %1621 = vmatprep.subr.mxu0 0.0
          %1622 = vmatpush1.msra.mxu0 0.0
          %1623 = vmatprep.subr.mxu0 0.0
          %1624 = vmatpush1.msra.mxu0 0.0
          %1625 = vmatprep.subr.mxu0 0.0
          %1626 = vmatpush1.msra.mxu0 0.0
          %1627 = vmatprep.subr.mxu0 0.0
          %1628 = vmatpush1.msra.mxu0 0.0
          %1629 = vmatprep.subr.mxu0 0.0
          %1630 = vmatpush1.msra.mxu0 0.0
          %1631 = vmatprep.subr.mxu0 0.0
          %1632 = vmatpush1.msra.mxu0 0.0
          %1633 = vmatprep.subr.mxu0 0.0
          %1634 = vmatpush1.msra.mxu0 0.0
          %1635 = vmatprep.subr.mxu0 0.0
          %1636 = vmatpush1.msra.mxu0 0.0
          %1637 = vmatprep.subr.mxu0 0.0
          %1638 = vmatpush1.msra.mxu0 0.0
          %1639 = vmatprep.subr.mxu0 0.0
          %1640 = vmatpush1.msra.mxu0 0.0
          %1641 = vmatprep.subr.mxu0 0.0
          %1642 = vmatpush1.msra.mxu0 0.0
          %1643 = vmatprep.subr.mxu0 0.0
          %1644 = vmatpush1.msra.mxu0 0.0
          %1645 = vmatprep.subr.mxu0 0.0
          %1646 = vmatpush1.msra.mxu0 0.0
          %1647 = vmatprep.subr.mxu0 0.0
          %1648 = vmatpush1.msra.mxu0 0.0
          %1649 = vmatprep.subr.mxu0 0.0
          %1650 = vmatpush1.msra.mxu0 0.0
          %1651 = vmatprep.subr.mxu0 0.0
          %1652 = vmatpush1.msra.mxu0 0.0
          %1653 = vmatprep.subr.mxu0 0.0
          %1654 = vmatpush1.msra.mxu0 0.0
          %1655 = vmatprep.mubr.f32.mxu0 0.0
          %1656 = vmatmul.mubr.f32.gmra.mrb[0].mxu0 %v1589
          %v1657 = vpop.f32.mrb[0].mxu0
          %v1658 = vadd.f32 %v1585, %v1657
          %v1659 = vpop.f32.mrb[0].mxu0
          %1660 = vdwg.mxu0
          %v1661 = vtanh.pop %v1658
          %1663 = vrot.lane.b32.xlu0 %v1661, 32
          %v1664 = vpop.permute.xlu0 %1663
          %v1666 = vsel %vm1587, %v1574, %v1664
          %v1667 = vld [vmem:[%s6] sm:$0xff]
          %v1668 = vld [vmem:[%s6 + $0x8] sm:$0xff]
          %v1669 = vld [vmem:[%s6 + $0x10] sm:$0xff]
          %v1670 = vld [vmem:[%s6 + $0x18] sm:$0xff]
          %v1671 = vld [vmem:[%s6 + $0x20] sm:$0xff]
          %v1672 = vld [vmem:[%s6 + $0x28] sm:$0xff]
          %v1673 = vld [vmem:[%s6 + $0x30] sm:$0xff]
          %v1674 = vld [vmem:[%s6 + $0x38] sm:$0xff]
          %v1675 = vld [vmem:[%s7] sm:$0x1]
          %v1677 = vlaneseq
          %v1678 = vshrl.u32 %v1677, 7
          %v1679 = vsub.s32 0, %v1678
          %v1680 = vrot.slane %v1675, %v1679
          %vm1682 = vcmask 523264
          %v1684 = vsel %vm1682, %v1666, 0
          %1686 = vmatprep.subr.mxu0 0.0
          %1687 = vmatpush1.msra.mxu0 %v1667
          %1688 = vmatprep.subr.mxu0 0.0
          %1689 = vmatpush1.msra.mxu0 %v1668
          %1690 = vmatprep.subr.mxu0 0.0
          %1691 = vmatpush1.msra.mxu0 %v1669
          %1692 = vmatprep.subr.mxu0 0.0
          %1693 = vmatpush1.msra.mxu0 %v1670
          %1694 = vmatprep.subr.mxu0 0.0
          %1695 = vmatpush1.msra.mxu0 %v1671
          %1696 = vmatprep.subr.mxu0 0.0
          %1697 = vmatpush1.msra.mxu0 %v1672
          %1698 = vmatprep.subr.mxu0 0.0
          %1699 = vmatpush1.msra.mxu0 %v1673
          %1700 = vmatprep.subr.mxu0 0.0
          %1701 = vmatpush1.msra.mxu0 %v1674
          %1702 = vmatprep.subr.mxu0 0.0
          %1703 = vmatpush1.msra.mxu0 0.0
          %1704 = vmatprep.subr.mxu0 0.0
          %1705 = vmatpush1.msra.mxu0 0.0
          %1706 = vmatprep.subr.mxu0 0.0
          %1707 = vmatpush1.msra.mxu0 0.0
          %1708 = vmatprep.subr.mxu0 0.0
          %1709 = vmatpush1.msra.mxu0 0.0
          %1710 = vmatprep.subr.mxu0 0.0
          %1711 = vmatpush1.msra.mxu0 0.0
          %1712 = vmatprep.subr.mxu0 0.0
          %1713 = vmatpush1.msra.mxu0 0.0
          %1714 = vmatprep.subr.mxu0 0.0
          %1715 = vmatpush1.msra.mxu0 0.0
          %1716 = vmatprep.subr.mxu0 0.0
          %1717 = vmatpush1.msra.mxu0 0.0
          %1718 = vmatprep.subr.mxu0 0.0
          %1719 = vmatpush1.msra.mxu0 0.0
          %1720 = vmatprep.subr.mxu0 0.0
          %1721 = vmatpush1.msra.mxu0 0.0
          %1722 = vmatprep.subr.mxu0 0.0
          %1723 = vmatpush1.msra.mxu0 0.0
          %1724 = vmatprep.subr.mxu0 0.0
          %1725 = vmatpush1.msra.mxu0 0.0
          %1726 = vmatprep.subr.mxu0 0.0
          %1727 = vmatpush1.msra.mxu0 0.0
          %1728 = vmatprep.subr.mxu0 0.0
          %1729 = vmatpush1.msra.mxu0 0.0
          %1730 = vmatprep.subr.mxu0 0.0
          %1731 = vmatpush1.msra.mxu0 0.0
          %1732 = vmatprep.subr.mxu0 0.0
          %1733 = vmatpush1.msra.mxu0 0.0
          %1734 = vmatprep.subr.mxu0 0.0
          %1735 = vmatpush1.msra.mxu0 0.0
          %1736 = vmatprep.subr.mxu0 0.0
          %1737 = vmatpush1.msra.mxu0 0.0
          %1738 = vmatprep.subr.mxu0 0.0
          %1739 = vmatpush1.msra.mxu0 0.0
          %1740 = vmatprep.subr.mxu0 0.0
          %1741 = vmatpush1.msra.mxu0 0.0
          %1742 = vmatprep.subr.mxu0 0.0
          %1743 = vmatpush1.msra.mxu0 0.0
          %1744 = vmatprep.subr.mxu0 0.0
          %1745 = vmatpush1.msra.mxu0 0.0
          %1746 = vmatprep.subr.mxu0 0.0
          %1747 = vmatpush1.msra.mxu0 0.0
          %1748 = vmatprep.subr.mxu0 0.0
          %1749 = vmatpush1.msra.mxu0 0.0
          %1750 = vmatprep.mubr.f32.mxu0 0.0
          %1751 = vmatmul.mubr.f32.gmra.mrb[0].mxu0 %v1684
          %v1752 = vpop.f32.mrb[0].mxu0
          %v1753 = vadd.f32 %v1680, %v1752
          %v1754 = vpop.f32.mrb[0].mxu0
          %1755 = vdwg.mxu0
          %v1756 = vsel %vm1567, %v1753, 0.0
          %v1757 = vrot.slane %v1756, 4
          %v1758 = vadd.f32 %v1756, %v1757
          %v1759 = vrot.slane %v1758, 2
          %v1760 = vadd.f32 %v1758, %v1759
          %v1761 = vrot.slane %v1760, 1
          %v1762 = vadd.f32 %v1760, %v1761
          %v1763 = vrcp.pop 4.0
          %v1764 = vmul.f32 %v1762, %v1763
          %v1765 = vsub.f32 %v1753, %v1764
          %v1766 = vmul.f32 %v1765, %v1765
          %v1767 = vsel %vm1567, %v1766, 0.0
          %v1768 = vrot.slane %v1767, 4
          %v1769 = vadd.f32 %v1767, %v1768
          %v1770 = vrot.slane %v1769, 2
          %v1771 = vadd.f32 %v1769, %v1770
          %v1772 = vrot.slane %v1771, 1
          %v1773 = vadd.f32 %v1771, %v1772
          %v1774 = vmul.f32 %v1773, %v1763
          %v1775 = vadd.f32 %v1774, 1e-05
          %v1776 = vrsqrt.pop %v1775
          %v1777 = vmul.f32 %v1765, %v1776
          %v1778 = vld [vmem:[%s8] sm:$0x1]
          %v1780 = vlaneseq
          %v1781 = vshrl.u32 %v1780, 7
          %v1782 = vsub.s32 0, %v1781
          %v1783 = vrot.slane %v1778, %v1782
          %v1785 = vmul.f32 %v1777, %v1783
          %v1786 = vld [vmem:[%s9] sm:$0x1]
          %v1788 = vlaneseq
          %v1789 = vshrl.u32 %v1788, 7
          %v1790 = vsub.s32 0, %v1789
          %v1791 = vrot.slane %v1786, %v1790
          %v1793 = vadd.f32 %v1785, %v1791
          %vm1794 = vcmp.ge.s32.totalorder %v1476, 16
          %v1795 = vmax.f32 %v1793, 0.0
          %v1796 = vsel %vm1794, %v1795, %v1793
          %v1797 = vmul.f32 %v1796, %v1796
          %v1798 = vsel %vm1567, %v1797, 0.0
          %1799 = vadd.xlane.f32.xlu0 %v1798
          %v1800 = vpop.xlane.xlu0 %1799
          %v1801 = vmax.f32 %v1800, 1e-24
          %v1802 = vrsqrt.pop %v1801
          %v1803 = vmul.f32 %v1796, %v1802
          %v1804 = vsel %vm1587, %v1803, 0.0
          %1805 = vst [vmem:[%s10] sm:$0xf] %v1804
        $region91: #{shopee_forward.2} parent=78 // pred_fallthru
          _
        // Predicated region
        $region92: #{shopee_forward.2} parent=78 // pred_check
          %p1806 = pneg %p249
        $region93: #{shopee_forward.2} parent=78 // pred_check_branch
          %1808 = sbr.rel (%p1806) target = $region95
        $region94: #{shopee_forward.2} parent=78 // pred_region
          _
        $region95: #{shopee_forward.2} parent=78 // pred_fallthru
          _
        // Predicated region
        $region96: #{shopee_forward.2} parent=78 // pred_check
          %p1809 = pneg %p249
        $region97: #{shopee_forward.2} parent=78 // pred_check_branch
          %1811 = sbr.rel (%p1809) target = $region99
        $region98: #{shopee_forward.2} parent=78 // pred_region
          _
        $region99: #{shopee_forward.2} parent=78 // pred_fallthru
          _
      $region79: #{shopee_forward.2} parent=5 // pred_fallthru
        _
      %p1812 = scmp.le.s32.totalorder 2, %s16
      // Predicated region
      $region100: #{shopee_forward.2} parent=5 // pred_check
        %p1813 = pneg %p1812
      $region101: #{shopee_forward.2} parent=5 // pred_check_branch
        %1815 = sbr.rel (%p1813) target = $region103
      $region102: #{shopee_forward.2} parent=5 // pred_region
        %s1816 = ssub.s32 %s16, 2
      $region103: #{shopee_forward.2} parent=5 // pred_fallthru
        _
    $region6: #{shopee_forward.2} parent=1 // loop_footer
      %s20 = sadd.s32 1, %s16
    $region7: #{shopee_forward.2} parent=1 // loop_footer_branch
      %15 = sbr.rel target = $region3
    $region8: #{shopee_forward.2} parent=1 // loop_exit
      _

</llo_original>
